<compile_context>
chip_gen: v6e
topology: v6e:2x2x1
jax: 0.10.0
libtpu: 0.0.40
codegen_flags: <defaults>
</compile_context>

<pallas_src>
import functools
import math

import jax
import jax.numpy as jnp
from jax.experimental import pallas as pl
from jax.experimental.pallas import tpu as pltpu


# --------------------------------------------------------------------------------------
# Plain-JAX geometry helpers (tiny; shared by the Pallas pipeline and the reference).
# --------------------------------------------------------------------------------------
def raydist_range(transform_mat3x4, corner_pt, src):
    """Min/max distance from the source (0, 0, src) to the transformed volume corners."""
    # corner_pt: (B, 8, 4) homogeneous, transform: (B, 3, 4)
    corners_t = jnp.einsum("bij,bkj->bki", transform_mat3x4, corner_pt)  # (B, 8, 3)
    src_pt = jnp.array([0.0, 0.0, 1.0], jnp.float32) * src
    d = jnp.linalg.norm(corners_t - src_pt, axis=-1)                     # (B, 8)
    return d.min(axis=1), d.max(axis=1)


def prost_grid(corner_pt, H, W, dist_min, dist_max, src, det, pix_spacing, num_samples):
    """Canonical homogeneous ray-sample grid, built component-major as (B, 4, M, H*W).

    Component-major construction means the largest kernel-1 input never needs an XLA
    transpose/relayout pass.
    """
    B = corner_pt.shape[0]
    M = num_samples
    P = H * W
    us = (jnp.arange(W, dtype=jnp.float32) - (W - 1) / 2.0) * pix_spacing   # detector x
    vs = (jnp.arange(H, dtype=jnp.float32) - (H - 1) / 2.0) * pix_spacing   # detector y
    uu, vv = jnp.meshgrid(us, vs, indexing="xy")                            # (H, W)
    det_plane = jnp.stack([uu, vv, -det * jnp.ones_like(uu)], axis=-1)      # (H, W, 3)
    src_pt = jnp.array([0.0, 0.0, 1.0], jnp.float32) * src                  # (3,)
    rays = det_plane - src_pt
    rays = rays / jnp.linalg.norm(rays, axis=-1, keepdims=True)             # (H, W, 3)
    rays_cp = rays.reshape(P, 3).T                                          # (3, P), tiny
    steps = (jnp.arange(M, dtype=jnp.float32) + 0.5) / M                    # (M,)
    t = dist_min[:, None] + (dist_max - dist_min)[:, None] * steps[None]    # (B, M)
    pts = (src_pt[None, :, None, None]
           + t[:, None, :, None] * rays_cp[None, :, None, :])               # (B, 3, M, P)
    half_ext = jnp.max(jnp.abs(corner_pt[..., :3]), axis=1)                 # (B, 3)
    pts = pts / half_ext[:, :, None, None]                                  # normalized [-1,1]
    ones = jnp.ones((B, 1, M, P), jnp.float32)
    return jnp.concatenate([pts, ones], axis=1)                             # (B, 4, M, P)


def _round_up(n, m):
    return -(-n // m) * m


def _pixel_tile(p, target, batch):
    """Multiple-of-128 pixel tile <= target; shrink until batch*blocks >= 2 (v7x 2 TCs)."""
    target = max(128, target - target % 128)
    tile = min(target, _round_up(p, 128))
    tile = max(128, tile - tile % 128)
    while batch * (_round_up(p, tile) // tile) < 2 and tile > 128:
        tile = max(128, (tile // 2) - ((tile // 2) % 128))
    return tile


def _sample_tile(m, target):
    """Sample-axis tile: full M if it fits, else the largest multiple-of-8 divisor."""
    if m <= target:
        return m
    t = (target // 8) * 8
    while t >= 8:
        if m % t == 0:
            return t
        t -= 8
    return m


# --------------------------------------------------------------------------------------
# Pallas kernel 1: folded-affine transform -> voxel coords -> floor/frac/clamp ->
# 8 flattened corner indices. Transform (already folded with the un-normalize) is in SMEM.
# --------------------------------------------------------------------------------------
def _transform_setup_kernel(a_ref, grid_ref, cidx_ref, frac_ref, *, vol_shape):
    # a_ref   : (B, 12) f32 in SMEM; row-major folded affine A, v_i = A[i, :] @ (x, y, z, 1)
    # grid_ref: (1, 4, TM, TP) homogeneous ray-sample points (component-major, lane-dense)
    # cidx_ref: (1, 8, TM, TP) int32 flattened corner indices (z, y, x) lo/hi, x fastest
    # frac_ref: (1, 3, TM, TP) f32 fractional offsets, rows = (x, y, z)
    D, Hv, Wv = vol_shape
    b = pl.program_id(0)

    gx = grid_ref[0, 0]
    gy = grid_ref[0, 1]
    gz = grid_ref[0, 2]
    gw = grid_ref[0, 3]

    def voxel_coord(row):
        o = row * 4
        # 12 SMEM scalar reads; broadcasts are hoisted naturally (no per-lane VMEM loads).
        return (a_ref[b, o + 0] * gx + a_ref[b, o + 1] * gy
                + a_ref[b, o + 2] * gz + a_ref[b, o + 3] * gw)

    def split(v, size):
        v0 = jnp.floor(v)
        lo = jnp.clip(v0, 0.0, size - 1.0).astype(jnp.int32)
        hi = jnp.clip(v0 + 1.0, 0.0, size - 1.0).astype(jnp.int32)
        return lo, hi, v - v0

    xl, xh, fx = split(voxel_coord(0), float(Wv))
    yl, yh, fy = split(voxel_coord(1), float(Hv))
    zl, zh, fz = split(voxel_coord(2), float(D))

    frac_ref[0, 0] = fx
    frac_ref[0, 1] = fy
    frac_ref[0, 2] = fz

    b00 = (zl * Hv + yl) * Wv
    b01 = (zl * Hv + yh) * Wv
    b10 = (zh * Hv + yl) * Wv
    b11 = (zh * Hv + yh) * Wv
    cidx_ref[0, 0] = b00 + xl
    cidx_ref[0, 1] = b00 + xh
    cidx_ref[0, 2] = b01 + xl
    cidx_ref[0, 3] = b01 + xh
    cidx_ref[0, 4] = b10 + xl
    cidx_ref[0, 5] = b10 + xh
    cidx_ref[0, 6] = b11 + xl
    cidx_ref[0, 7] = b11 + xh


# --------------------------------------------------------------------------------------
# Pallas kernel 2: trilinear corner combine + ray-sample reduction (the DRR).
# Sample axis is a trailing "arbitrary" grid axis; the resident output block accumulates.
# --------------------------------------------------------------------------------------
def _trilinear_raysum_kernel(vals_ref, frac_ref, out_ref):
    # vals_ref: (1, 8, TM, TP) gathered corner voxels (bf16), corner order (z,y,x), x fastest
    # frac_ref: (1, 3, TM, TP) f32 fractional offsets, rows = (x, y, z)
    # out_ref : (1, 1, TP)     f32 lane-dense projection tile (resident across sample steps)
    m_step = pl.program_id(2)

    def corner(k):
        return vals_ref[0, k].astype(jnp.float32)

    fx = frac_ref[0, 0]
    fy = frac_ref[0, 1]
    fz = frac_ref[0, 2]
    gx = 1.0 - fx
    c00 = corner(0) * gx + corner(1) * fx
    c01 = corner(2) * gx + corner(3) * fx
    c10 = corner(4) * gx + corner(5) * fx
    c11 = corner(6) * gx + corner(7) * fx
    c0 = c00 * (1.0 - fy) + c01 * fy
    c1 = c10 * (1.0 - fy) + c11 * fy
    interp = c0 * (1.0 - fz) + c1 * fz                                  # (TM, TP)
    partial = jnp.sum(interp, axis=0, keepdims=True)[None]              # (1, 1, TP)

    @pl.when(m_step == 0)
    def _():
        out_ref[...] = jnp.zeros_like(out_ref)

    out_ref[...] += partial


# --------------------------------------------------------------------------------------
# Forward pass (Pallas pipeline).
# --------------------------------------------------------------------------------------
@functools.partial(jax.jit, static_argnames=("num_samples", "block_pixels",
                                             "block_samples", "vals_dtype"))
def prost_forward(x, y, transform_mat3x4, corner_pt, param, *,
                  num_samples=16, block_pixels=4096, block_samples=32,
                  vals_dtype=jnp.bfloat16):
    src, det, pix_spacing = param[0], param[1], param[2]
    # param[3] (step_size) intentionally unused: see TODO in prost_grid.
    B = transform_mat3x4.shape[0]
    H, W = y.shape[2], y.shape[3]
    M = num_samples
    vol = x[:, 0].astype(jnp.float32)          # ProST assumes a single-channel CT volume
    D, Hv, Wv = vol.shape[1], vol.shape[2], vol.shape[3]
    P = H * W

    dist_min, dist_max = raydist_range(transform_mat3x4, corner_pt, src)
    grid_cd = prost_grid(corner_pt, H, W, dist_min, dist_max, src, det, pix_spacing, M)

    # ---- tile selection + pad to a multiple of the tile (no full-axis fallback) ---------
    tp = _pixel_tile(P, block_pixels, B)
    tm_s = _sample_tile(M, block_samples)
    P_pad = _round_up(P, tp)
    if P_pad != P:
        # zero-pad: homogeneous w = 0 maps every padded point to voxel 0 (in-bounds gather)
        grid_cd = jnp.pad(grid_cd, ((0, 0), (0, 0), (0, 0), (0, P_pad - P)))

    # ---- fold the normalized->voxel mapping into one per-batch affine (lives in SMEM) ---
    sizes = jnp.array([Wv, Hv, D], jnp.float32)                      # rows: x, y, z
    A = transform_mat3x4.astype(jnp.float32) * (0.5 * sizes)[None, :, None]
    A = A.at[:, :, 3].add(0.5 * sizes[None, :])
    A_flat = A.reshape(B, 12)

    # ---- kernel 1: fused transform / interpolation setup / flat corner indices ----------
    k1 = functools.partial(_transform_setup_kernel, vol_shape=(D, Hv, Wv))
    cidx, frac = pl.pallas_call(
        k1,
        out_shape=(jax.ShapeDtypeStruct((B, 8, M, P_pad), jnp.int32),
                   jax.ShapeDtypeStruct((B, 3, M, P_pad), jnp.float32)),
        grid_spec=pltpu.PrefetchScalarGridSpec(
            num_scalar_prefetch=0,
            grid=(B, M // tm_s, P_pad // tp),
            in_specs=[
                pl.BlockSpec(memory_space=pltpu.MemorySpace.SMEM),
                pl.BlockSpec((1, 4, tm_s, tp), lambda b, m, p: (b, 0, m, p)),
            ],
            out_specs=(
                pl.BlockSpec((1, 8, tm_s, tp), lambda b, m, p: (b, 0, m, p)),
                pl.BlockSpec((1, 3, tm_s, tp), lambda b, m, p: (b, 0, m, p)),
            ),
        ),
        compiler_params=pltpu.CompilerParams(
            dimension_semantics=("parallel", "parallel", "parallel")),
    )(A_flat, grid_cd)

    # ---- data-dependent 8-corner gather (bf16 values) ------------------------------------
    # TODO(synk): Mosaic has no general dynamic vector gather, so the voxel fetch stays in
    # XLA between the two Pallas kernels (x-adjacent pair fetch left as a future tweak).
    vol_flat = vol.astype(vals_dtype).reshape(B, D * Hv * Wv)
    vals = jax.vmap(lambda vf, idx: vf[idx])(vol_flat, cidx)         # (B, 8, M, P_pad)

    # ---- kernel 2: trilinear combine + ray integration (lane-dense output) --------------
    proj = pl.pallas_call(
        _trilinear_raysum_kernel,
        out_shape=jax.ShapeDtypeStruct((B, 1, P_pad), jnp.float32),
        grid_spec=pltpu.PrefetchScalarGridSpec(
            num_scalar_prefetch=0,
            grid=(B, P_pad // tp, M // tm_s),
            in_specs=[
                pl.BlockSpec((1, 8, tm_s, tp), lambda b, p, m: (b, 0, m, p)),
                pl.BlockSpec((1, 3, tm_s, tp), lambda b, p, m: (b, 0, m, p)),
            ],
            out_specs=pl.BlockSpec((1, 1, tp), lambda b, p, m: (b, 0, p)),
        ),
        compiler_params=pltpu.CompilerParams(
            dimension_semantics=("parallel", "parallel", "arbitrary")),
    )(vals, frac)
    return proj[:, 0, :P].reshape(B, H, W).astype(x.dtype)


# --------------------------------------------------------------------------------------
# Pure-JAX reference (same forward semantics, same bf16 value quantization, no Pallas).
# --------------------------------------------------------------------------------------
def prost_reference(x, y, transform_mat3x4, corner_pt, param, num_samples,
                    vals_dtype=jnp.bfloat16):
    src, det, pix_spacing = param[0], param[1], param[2]
    B = transform_mat3x4.shape[0]
    H, W = y.shape[2], y.shape[3]
    M = num_samples
    vol = x[:, 0].astype(jnp.float32)
    D, Hv, Wv = vol.shape[1], vol.shape[2], vol.shape[3]

    dist_min, dist_max = raydist_range(transform_mat3x4, corner_pt, src)
    grid_cd = prost_grid(corner_pt, H, W, dist_min, dist_max, src, det, pix_spacing, M)
    g = grid_cd.reshape(B, 4, M * H * W)

    T = transform_mat3x4.astype(jnp.float32)
    pts = jnp.einsum("bij,bjn->bin", T, g)                                   # (B, 3, N)
    sizes = jnp.array([Wv, Hv, D], jnp.float32).reshape(1, 3, 1)
    v = sizes * (pts * 0.5 + 0.5)
    v0 = jnp.floor(v)
    f = v - v0
    lo = jnp.clip(v0, 0.0, sizes - 1.0).astype(jnp.int32)
    hi = jnp.clip(v0 + 1.0, 0.0, sizes - 1.0).astype(jnp.int32)
    x0, y0, z0 = lo[:, 0], lo[:, 1], lo[:, 2]
    x1, y1, z1 = hi[:, 0], hi[:, 1], hi[:, 2]
    fx, fy, fz = f[:, 0], f[:, 1], f[:, 2]

    vol_flat = vol.astype(vals_dtype).reshape(B, -1)
    gather = jax.vmap(lambda vf, i: vf[i].astype(jnp.float32))

    def flat_idx(zz, yy, xx):
        return (zz * Hv + yy) * Wv + xx

    c000 = gather(vol_flat, flat_idx(z0, y0, x0))
    c001 = gather(vol_flat, flat_idx(z0, y0, x1))
    c010 = gather(vol_flat, flat_idx(z0, y1, x0))
    c011 = gather(vol_flat, flat_idx(z0, y1, x1))
    c100 = gather(vol_flat, flat_idx(z1, y0, x0))
    c101 = gather(vol_flat, flat_idx(z1, y0, x1))
    c110 = gather(vol_flat, flat_idx(z1, y1, x0))
    c111 = gather(vol_flat, flat_idx(z1, y1, x1))
    wx0, wy0, wz0 = 1.0 - fx, 1.0 - fy, 1.0 - fz
    interp = ((wz0 * wy0 * wx0) * c000 + (wz0 * wy0 * fx) * c001
              + (wz0 * fy * wx0) * c010 + (wz0 * fy * fx) * c011
              + (fz * wy0 * wx0) * c100 + (fz * wy0 * fx) * c101
              + (fz * fy * wx0) * c110 + (fz * fy * fx) * c111)
    return interp.reshape(B, M, H * W).sum(axis=1).reshape(B, H, W)


# --------------------------------------------------------------------------------------
if __name__ == "__main__":
    key = jax.random.PRNGKey(0)
    B = 2
    D = Hv = Wv = 16          # CT volume (single channel)
    H = W = 16                # detector
    M = 16                    # ray samples

    k1, _ = jax.random.split(key)
    x = jax.random.uniform(k1, (B, 1, D, Hv, Wv), dtype=jnp.float32)
    y = jnp.zeros((B, 1, H, W), jnp.float32)      # only its spatial size is used

    # small rigid-ish transforms (rotation about z + small translation), per batch
    def make_T(angle, t):
        c, s = math.cos(angle), math.sin(angle)
        R = jnp.array([[c, -s, 0.0], [s, c, 0.0], [0.0, 0.0, 1.0]], jnp.float32)
        return jnp.concatenate([R, jnp.asarray(t, jnp.float32).reshape(3, 1)], axis=1)

    transform_mat3x4 = jnp.stack([
        make_T(0.10, [0.05, -0.02, 0.03]),
        make_T(-0.20, [-0.04, 0.06, -0.01]),
    ])                                             # (B, 3, 4)

    # corners of the normalized [-1, 1]^3 CT bounding box (homogeneous)
    signs = jnp.array([[sx, sy, sz]
                       for sx in (-1.0, 1.0) for sy in (-1.0, 1.0) for sz in (-1.0, 1.0)],
                      jnp.float32)
    corner_pt = jnp.tile(jnp.concatenate([signs, jnp.ones((8, 1), jnp.float32)], axis=1)[None],
                         (B, 1, 1))                # (B, 8, 4)

    src_d, det_d = 4.0, 2.0
    pix_spacing = 3.0 / W
    step_size = 2.0 * math.sqrt(3.0) / M
    param = jnp.array([src_d, det_d, pix_spacing, step_size], jnp.float32)

    out = prost_forward(x, y, transform_mat3x4, corner_pt, param, num_samples=M)
    out = jax.block_until_ready(out)

    ref = prost_reference(x, y, transform_mat3x4, corner_pt, param, M)

    assert out.shape == (B, H, W), out.shape
    assert bool(jnp.all(jnp.isfinite(out)))
    err = float(jnp.max(jnp.abs(out - ref)))
    assert err < 5e-3, f"mismatch vs reference: {err}"
    print("KERNEL_OK")
</pallas_src>

<mosaic_0001>
module attributes {stable_mosaic.version = 11 : i64} {
  func.func @_transform_setup_kernel(%arg0: i32, %arg1: i32, %arg2: i32, %arg3: memref<2x12xf32, #tpu.memory_space<smem>>, %arg4: memref<1x4x16x256xf32, #tpu.memory_space<vmem>>, %arg5: memref<1x8x16x256xi32, #tpu.memory_space<vmem>>, %arg6: memref<1x3x16x256xf32, #tpu.memory_space<vmem>>) attributes {dimension_semantics = [#tpu.dimension_semantics<parallel>, #tpu.dimension_semantics<parallel>, #tpu.dimension_semantics<parallel>], iteration_bounds = array<i64: 2, 1, 1>, scalar_prefetch = 0 : i64, scratch_operands = 0 : i64, tpu.core_type = #tpu.core_type<tc>, window_params = [{transform_indices = @transform_0, window_bounds = array<i64: 2, 12>}, {transform_indices = @transform_1, window_bounds = array<i64: 1, 4, 16, 256>}, {transform_indices = @transform_2, window_bounds = array<i64: 1, 8, 16, 256>}, {transform_indices = @transform_3, window_bounds = array<i64: 1, 3, 16, 256>}]} {
    %c0 = arith.constant 0 : index
    %c0_0 = arith.constant 0 : index
    %c0_1 = arith.constant 0 : index
    %c0_2 = arith.constant 0 : index
    %0 = vector.load %arg4[%c0, %c0_0, %c0_1, %c0_2] : memref<1x4x16x256xf32, #tpu.memory_space<vmem>>, vector<1x1x16x256xf32>
    %1 = vector.shape_cast %0 : vector<1x1x16x256xf32> to vector<16x256xf32>
    %c0_3 = arith.constant 0 : index
    %c1 = arith.constant 1 : index
    %c0_4 = arith.constant 0 : index
    %c0_5 = arith.constant 0 : index
    %2 = vector.load %arg4[%c0_3, %c1, %c0_4, %c0_5] : memref<1x4x16x256xf32, #tpu.memory_space<vmem>>, vector<1x1x16x256xf32>
    %3 = vector.shape_cast %2 : vector<1x1x16x256xf32> to vector<16x256xf32>
    %c0_6 = arith.constant 0 : index
    %c2 = arith.constant 2 : index
    %c0_7 = arith.constant 0 : index
    %c0_8 = arith.constant 0 : index
    %4 = vector.load %arg4[%c0_6, %c2, %c0_7, %c0_8] : memref<1x4x16x256xf32, #tpu.memory_space<vmem>>, vector<1x1x16x256xf32>
    %5 = vector.shape_cast %4 : vector<1x1x16x256xf32> to vector<16x256xf32>
    %c0_9 = arith.constant 0 : index
    %c3 = arith.constant 3 : index
    %c0_10 = arith.constant 0 : index
    %c0_11 = arith.constant 0 : index
    %6 = vector.load %arg4[%c0_9, %c3, %c0_10, %c0_11] : memref<1x4x16x256xf32, #tpu.memory_space<vmem>>, vector<1x1x16x256xf32>
    %7 = vector.shape_cast %6 : vector<1x1x16x256xf32> to vector<16x256xf32>
    %8 = arith.index_cast %arg0 : i32 to index
    %c0_12 = arith.constant 0 : index
    %9 = memref.load %arg3[%8, %c0_12] : memref<2x12xf32, #tpu.memory_space<smem>>
    %10 = vector.broadcast %9 : f32 to vector<16x256xf32>
    %11 = arith.mulf %10, %1 : vector<16x256xf32>
    %12 = arith.index_cast %arg0 : i32 to index
    %c1_13 = arith.constant 1 : index
    %13 = memref.load %arg3[%12, %c1_13] : memref<2x12xf32, #tpu.memory_space<smem>>
    %14 = vector.broadcast %13 : f32 to vector<16x256xf32>
    %15 = arith.mulf %14, %3 : vector<16x256xf32>
    %16 = arith.addf %11, %15 : vector<16x256xf32>
    %17 = arith.index_cast %arg0 : i32 to index
    %c2_14 = arith.constant 2 : index
    %18 = memref.load %arg3[%17, %c2_14] : memref<2x12xf32, #tpu.memory_space<smem>>
    %19 = vector.broadcast %18 : f32 to vector<16x256xf32>
    %20 = arith.mulf %19, %5 : vector<16x256xf32>
    %21 = arith.addf %16, %20 : vector<16x256xf32>
    %22 = arith.index_cast %arg0 : i32 to index
    %c3_15 = arith.constant 3 : index
    %23 = memref.load %arg3[%22, %c3_15] : memref<2x12xf32, #tpu.memory_space<smem>>
    %24 = vector.broadcast %23 : f32 to vector<16x256xf32>
    %25 = arith.mulf %24, %7 : vector<16x256xf32>
    %26 = arith.addf %21, %25 : vector<16x256xf32>
    %27 = math.floor %26 : vector<16x256xf32>
    %cst = arith.constant 0.000000e+00 : f32
    %cst_16 = arith.constant 1.500000e+01 : f32
    %28 = vector.broadcast %cst : f32 to vector<16x256xf32>
    %29 = arith.maximumf %28, %27 : vector<16x256xf32>
    %30 = vector.broadcast %cst_16 : f32 to vector<16x256xf32>
    %31 = arith.minimumf %30, %29 : vector<16x256xf32>
    %32 = arith.fptosi %31 : vector<16x256xf32> to vector<16x256xi32>
    %cst_17 = arith.constant 1.000000e+00 : f32
    %33 = vector.broadcast %cst_17 : f32 to vector<16x256xf32>
    %34 = arith.addf %27, %33 : vector<16x256xf32>
    %cst_18 = arith.constant 0.000000e+00 : f32
    %cst_19 = arith.constant 1.500000e+01 : f32
    %35 = vector.broadcast %cst_18 : f32 to vector<16x256xf32>
    %36 = arith.maximumf %35, %34 : vector<16x256xf32>
    %37 = vector.broadcast %cst_19 : f32 to vector<16x256xf32>
    %38 = arith.minimumf %37, %36 : vector<16x256xf32>
    %39 = arith.fptosi %38 : vector<16x256xf32> to vector<16x256xi32>
    %40 = arith.subf %26, %27 : vector<16x256xf32>
    %41 = arith.index_cast %arg0 : i32 to index
    %c4 = arith.constant 4 : index
    %42 = memref.load %arg3[%41, %c4] : memref<2x12xf32, #tpu.memory_space<smem>>
    %43 = vector.broadcast %42 : f32 to vector<16x256xf32>
    %44 = arith.mulf %43, %1 : vector<16x256xf32>
    %45 = arith.index_cast %arg0 : i32 to index
    %c5 = arith.constant 5 : index
    %46 = memref.load %arg3[%45, %c5] : memref<2x12xf32, #tpu.memory_space<smem>>
    %47 = vector.broadcast %46 : f32 to vector<16x256xf32>
    %48 = arith.mulf %47, %3 : vector<16x256xf32>
    %49 = arith.addf %44, %48 : vector<16x256xf32>
    %50 = arith.index_cast %arg0 : i32 to index
    %c6 = arith.constant 6 : index
    %51 = memref.load %arg3[%50, %c6] : memref<2x12xf32, #tpu.memory_space<smem>>
    %52 = vector.broadcast %51 : f32 to vector<16x256xf32>
    %53 = arith.mulf %52, %5 : vector<16x256xf32>
    %54 = arith.addf %49, %53 : vector<16x256xf32>
    %55 = arith.index_cast %arg0 : i32 to index
    %c7 = arith.constant 7 : index
    %56 = memref.load %arg3[%55, %c7] : memref<2x12xf32, #tpu.memory_space<smem>>
    %57 = vector.broadcast %56 : f32 to vector<16x256xf32>
    %58 = arith.mulf %57, %7 : vector<16x256xf32>
    %59 = arith.addf %54, %58 : vector<16x256xf32>
    %60 = math.floor %59 : vector<16x256xf32>
    %cst_20 = arith.constant 0.000000e+00 : f32
    %cst_21 = arith.constant 1.500000e+01 : f32
    %61 = vector.broadcast %cst_20 : f32 to vector<16x256xf32>
    %62 = arith.maximumf %61, %60 : vector<16x256xf32>
    %63 = vector.broadcast %cst_21 : f32 to vector<16x256xf32>
    %64 = arith.minimumf %63, %62 : vector<16x256xf32>
    %65 = arith.fptosi %64 : vector<16x256xf32> to vector<16x256xi32>
    %cst_22 = arith.constant 1.000000e+00 : f32
    %66 = vector.broadcast %cst_22 : f32 to vector<16x256xf32>
    %67 = arith.addf %60, %66 : vector<16x256xf32>
    %cst_23 = arith.constant 0.000000e+00 : f32
    %cst_24 = arith.constant 1.500000e+01 : f32
    %68 = vector.broadcast %cst_23 : f32 to vector<16x256xf32>
    %69 = arith.maximumf %68, %67 : vector<16x256xf32>
    %70 = vector.broadcast %cst_24 : f32 to vector<16x256xf32>
    %71 = arith.minimumf %70, %69 : vector<16x256xf32>
    %72 = arith.fptosi %71 : vector<16x256xf32> to vector<16x256xi32>
    %73 = arith.subf %59, %60 : vector<16x256xf32>
    %74 = arith.index_cast %arg0 : i32 to index
    %c8 = arith.constant 8 : index
    %75 = memref.load %arg3[%74, %c8] : memref<2x12xf32, #tpu.memory_space<smem>>
    %76 = vector.broadcast %75 : f32 to vector<16x256xf32>
    %77 = arith.mulf %76, %1 : vector<16x256xf32>
    %78 = arith.index_cast %arg0 : i32 to index
    %c9 = arith.constant 9 : index
    %79 = memref.load %arg3[%78, %c9] : memref<2x12xf32, #tpu.memory_space<smem>>
    %80 = vector.broadcast %79 : f32 to vector<16x256xf32>
    %81 = arith.mulf %80, %3 : vector<16x256xf32>
    %82 = arith.addf %77, %81 : vector<16x256xf32>
    %83 = arith.index_cast %arg0 : i32 to index
    %c10 = arith.constant 10 : index
    %84 = memref.load %arg3[%83, %c10] : memref<2x12xf32, #tpu.memory_space<smem>>
    %85 = vector.broadcast %84 : f32 to vector<16x256xf32>
    %86 = arith.mulf %85, %5 : vector<16x256xf32>
    %87 = arith.addf %82, %86 : vector<16x256xf32>
    %88 = arith.index_cast %arg0 : i32 to index
    %c11 = arith.constant 11 : index
    %89 = memref.load %arg3[%88, %c11] : memref<2x12xf32, #tpu.memory_space<smem>>
    %90 = vector.broadcast %89 : f32 to vector<16x256xf32>
    %91 = arith.mulf %90, %7 : vector<16x256xf32>
    %92 = arith.addf %87, %91 : vector<16x256xf32>
    %93 = math.floor %92 : vector<16x256xf32>
    %cst_25 = arith.constant 0.000000e+00 : f32
    %cst_26 = arith.constant 1.500000e+01 : f32
    %94 = vector.broadcast %cst_25 : f32 to vector<16x256xf32>
    %95 = arith.maximumf %94, %93 : vector<16x256xf32>
    %96 = vector.broadcast %cst_26 : f32 to vector<16x256xf32>
    %97 = arith.minimumf %96, %95 : vector<16x256xf32>
    %98 = arith.fptosi %97 : vector<16x256xf32> to vector<16x256xi32>
    %cst_27 = arith.constant 1.000000e+00 : f32
    %99 = vector.broadcast %cst_27 : f32 to vector<16x256xf32>
    %100 = arith.addf %93, %99 : vector<16x256xf32>
    %cst_28 = arith.constant 0.000000e+00 : f32
    %cst_29 = arith.constant 1.500000e+01 : f32
    %101 = vector.broadcast %cst_28 : f32 to vector<16x256xf32>
    %102 = arith.maximumf %101, %100 : vector<16x256xf32>
    %103 = vector.broadcast %cst_29 : f32 to vector<16x256xf32>
    %104 = arith.minimumf %103, %102 : vector<16x256xf32>
    %105 = arith.fptosi %104 : vector<16x256xf32> to vector<16x256xi32>
    %106 = arith.subf %92, %93 : vector<16x256xf32>
    %c0_30 = arith.constant 0 : index
    %c0_31 = arith.constant 0 : index
    %c0_32 = arith.constant 0 : index
    %c0_33 = arith.constant 0 : index
    %107 = vector.load %arg6[%c0_30, %c0_31, %c0_32, %c0_33] : memref<1x3x16x256xf32, #tpu.memory_space<vmem>>, vector<1x1x16x256xf32>
    %108 = vector.shape_cast %107 : vector<1x1x16x256xf32> to vector<16x256xf32>
    %109 = vector.shape_cast %40 : vector<16x256xf32> to vector<1x1x16x256xf32>
    tpu.vector_store %arg6[%c0_30, %c0_31, %c0_32, %c0_33], %109 {strides = array<i32>} : memref<1x3x16x256xf32, #tpu.memory_space<vmem>>, vector<1x1x16x256xf32>,
    %c0_34 = arith.constant 0 : index
    %c1_35 = arith.constant 1 : index
    %c0_36 = arith.constant 0 : index
    %c0_37 = arith.constant 0 : index
    %110 = vector.load %arg6[%c0_34, %c1_35, %c0_36, %c0_37] : memref<1x3x16x256xf32, #tpu.memory_space<vmem>>, vector<1x1x16x256xf32>
    %111 = vector.shape_cast %110 : vector<1x1x16x256xf32> to vector<16x256xf32>
    %112 = vector.shape_cast %73 : vector<16x256xf32> to vector<1x1x16x256xf32>
    tpu.vector_store %arg6[%c0_34, %c1_35, %c0_36, %c0_37], %112 {strides = array<i32>} : memref<1x3x16x256xf32, #tpu.memory_space<vmem>>, vector<1x1x16x256xf32>,
    %c0_38 = arith.constant 0 : index
    %c2_39 = arith.constant 2 : index
    %c0_40 = arith.constant 0 : index
    %c0_41 = arith.constant 0 : index
    %113 = vector.load %arg6[%c0_38, %c2_39, %c0_40, %c0_41] : memref<1x3x16x256xf32, #tpu.memory_space<vmem>>, vector<1x1x16x256xf32>
    %114 = vector.shape_cast %113 : vector<1x1x16x256xf32> to vector<16x256xf32>
    %115 = vector.shape_cast %106 : vector<16x256xf32> to vector<1x1x16x256xf32>
    tpu.vector_store %arg6[%c0_38, %c2_39, %c0_40, %c0_41], %115 {strides = array<i32>} : memref<1x3x16x256xf32, #tpu.memory_space<vmem>>, vector<1x1x16x256xf32>,
    %c16_i32 = arith.constant 16 : i32
    %116 = vector.broadcast %c16_i32 : i32 to vector<16x256xi32>
    %117 = arith.muli %98, %116 : vector<16x256xi32>
    %118 = arith.addi %117, %65 : vector<16x256xi32>
    %c16_i32_42 = arith.constant 16 : i32
    %119 = vector.broadcast %c16_i32_42 : i32 to vector<16x256xi32>
    %120 = arith.muli %118, %119 : vector<16x256xi32>
    %c16_i32_43 = arith.constant 16 : i32
    %121 = vector.broadcast %c16_i32_43 : i32 to vector<16x256xi32>
    %122 = arith.muli %98, %121 : vector<16x256xi32>
    %123 = arith.addi %122, %72 : vector<16x256xi32>
    %c16_i32_44 = arith.constant 16 : i32
    %124 = vector.broadcast %c16_i32_44 : i32 to vector<16x256xi32>
    %125 = arith.muli %123, %124 : vector<16x256xi32>
    %c16_i32_45 = arith.constant 16 : i32
    %126 = vector.broadcast %c16_i32_45 : i32 to vector<16x256xi32>
    %127 = arith.muli %105, %126 : vector<16x256xi32>
    %128 = arith.addi %127, %65 : vector<16x256xi32>
    %c16_i32_46 = arith.constant 16 : i32
    %129 = vector.broadcast %c16_i32_46 : i32 to vector<16x256xi32>
    %130 = arith.muli %128, %129 : vector<16x256xi32>
    %c16_i32_47 = arith.constant 16 : i32
    %131 = vector.broadcast %c16_i32_47 : i32 to vector<16x256xi32>
    %132 = arith.muli %105, %131 : vector<16x256xi32>
    %133 = arith.addi %132, %72 : vector<16x256xi32>
    %c16_i32_48 = arith.constant 16 : i32
    %134 = vector.broadcast %c16_i32_48 : i32 to vector<16x256xi32>
    %135 = arith.muli %133, %134 : vector<16x256xi32>
    %136 = arith.addi %120, %32 : vector<16x256xi32>
    %c0_49 = arith.constant 0 : index
    %c0_50 = arith.constant 0 : index
    %c0_51 = arith.constant 0 : index
    %c0_52 = arith.constant 0 : index
    %137 = vector.load %arg5[%c0_49, %c0_50, %c0_51, %c0_52] : memref<1x8x16x256xi32, #tpu.memory_space<vmem>>, vector<1x1x16x256xi32>
    %138 = vector.shape_cast %137 : vector<1x1x16x256xi32> to vector<16x256xi32>
    %139 = vector.shape_cast %136 : vector<16x256xi32> to vector<1x1x16x256xi32>
    tpu.vector_store %arg5[%c0_49, %c0_50, %c0_51, %c0_52], %139 {strides = array<i32>} : memref<1x8x16x256xi32, #tpu.memory_space<vmem>>, vector<1x1x16x256xi32>,
    %140 = arith.addi %120, %39 : vector<16x256xi32>
    %c0_53 = arith.constant 0 : index
    %c1_54 = arith.constant 1 : index
    %c0_55 = arith.constant 0 : index
    %c0_56 = arith.constant 0 : index
    %141 = vector.load %arg5[%c0_53, %c1_54, %c0_55, %c0_56] : memref<1x8x16x256xi32, #tpu.memory_space<vmem>>, vector<1x1x16x256xi32>
    %142 = vector.shape_cast %141 : vector<1x1x16x256xi32> to vector<16x256xi32>
    %143 = vector.shape_cast %140 : vector<16x256xi32> to vector<1x1x16x256xi32>
    tpu.vector_store %arg5[%c0_53, %c1_54, %c0_55, %c0_56], %143 {strides = array<i32>} : memref<1x8x16x256xi32, #tpu.memory_space<vmem>>, vector<1x1x16x256xi32>,
    %144 = arith.addi %125, %32 : vector<16x256xi32>
    %c0_57 = arith.constant 0 : index
    %c2_58 = arith.constant 2 : index
    %c0_59 = arith.constant 0 : index
    %c0_60 = arith.constant 0 : index
    %145 = vector.load %arg5[%c0_57, %c2_58, %c0_59, %c0_60] : memref<1x8x16x256xi32, #tpu.memory_space<vmem>>, vector<1x1x16x256xi32>
    %146 = vector.shape_cast %145 : vector<1x1x16x256xi32> to vector<16x256xi32>
    %147 = vector.shape_cast %144 : vector<16x256xi32> to vector<1x1x16x256xi32>
    tpu.vector_store %arg5[%c0_57, %c2_58, %c0_59, %c0_60], %147 {strides = array<i32>} : memref<1x8x16x256xi32, #tpu.memory_space<vmem>>, vector<1x1x16x256xi32>,
    %148 = arith.addi %125, %39 : vector<16x256xi32>
    %c0_61 = arith.constant 0 : index
    %c3_62 = arith.constant 3 : index
    %c0_63 = arith.constant 0 : index
    %c0_64 = arith.constant 0 : index
    %149 = vector.load %arg5[%c0_61, %c3_62, %c0_63, %c0_64] : memref<1x8x16x256xi32, #tpu.memory_space<vmem>>, vector<1x1x16x256xi32>
    %150 = vector.shape_cast %149 : vector<1x1x16x256xi32> to vector<16x256xi32>
    %151 = vector.shape_cast %148 : vector<16x256xi32> to vector<1x1x16x256xi32>
    tpu.vector_store %arg5[%c0_61, %c3_62, %c0_63, %c0_64], %151 {strides = array<i32>} : memref<1x8x16x256xi32, #tpu.memory_space<vmem>>, vector<1x1x16x256xi32>,
    %152 = arith.addi %130, %32 : vector<16x256xi32>
    %c0_65 = arith.constant 0 : index
    %c4_66 = arith.constant 4 : index
    %c0_67 = arith.constant 0 : index
    %c0_68 = arith.constant 0 : index
    %153 = vector.load %arg5[%c0_65, %c4_66, %c0_67, %c0_68] : memref<1x8x16x256xi32, #tpu.memory_space<vmem>>, vector<1x1x16x256xi32>
    %154 = vector.shape_cast %153 : vector<1x1x16x256xi32> to vector<16x256xi32>
    %155 = vector.shape_cast %152 : vector<16x256xi32> to vector<1x1x16x256xi32>
    tpu.vector_store %arg5[%c0_65, %c4_66, %c0_67, %c0_68], %155 {strides = array<i32>} : memref<1x8x16x256xi32, #tpu.memory_space<vmem>>, vector<1x1x16x256xi32>,
    %156 = arith.addi %130, %39 : vector<16x256xi32>
    %c0_69 = arith.constant 0 : index
    %c5_70 = arith.constant 5 : index
    %c0_71 = arith.constant 0 : index
    %c0_72 = arith.constant 0 : index
    %157 = vector.load %arg5[%c0_69, %c5_70, %c0_71, %c0_72] : memref<1x8x16x256xi32, #tpu.memory_space<vmem>>, vector<1x1x16x256xi32>
    %158 = vector.shape_cast %157 : vector<1x1x16x256xi32> to vector<16x256xi32>
    %159 = vector.shape_cast %156 : vector<16x256xi32> to vector<1x1x16x256xi32>
    tpu.vector_store %arg5[%c0_69, %c5_70, %c0_71, %c0_72], %159 {strides = array<i32>} : memref<1x8x16x256xi32, #tpu.memory_space<vmem>>, vector<1x1x16x256xi32>,
    %160 = arith.addi %135, %32 : vector<16x256xi32>
    %c0_73 = arith.constant 0 : index
    %c6_74 = arith.constant 6 : index
    %c0_75 = arith.constant 0 : index
    %c0_76 = arith.constant 0 : index
    %161 = vector.load %arg5[%c0_73, %c6_74, %c0_75, %c0_76] : memref<1x8x16x256xi32, #tpu.memory_space<vmem>>, vector<1x1x16x256xi32>
    %162 = vector.shape_cast %161 : vector<1x1x16x256xi32> to vector<16x256xi32>
    %163 = vector.shape_cast %160 : vector<16x256xi32> to vector<1x1x16x256xi32>
    tpu.vector_store %arg5[%c0_73, %c6_74, %c0_75, %c0_76], %163 {strides = array<i32>} : memref<1x8x16x256xi32, #tpu.memory_space<vmem>>, vector<1x1x16x256xi32>,
    %164 = arith.addi %135, %39 : vector<16x256xi32>
    %c0_77 = arith.constant 0 : index
    %c7_78 = arith.constant 7 : index
    %c0_79 = arith.constant 0 : index
    %c0_80 = arith.constant 0 : index
    %165 = vector.load %arg5[%c0_77, %c7_78, %c0_79, %c0_80] : memref<1x8x16x256xi32, #tpu.memory_space<vmem>>, vector<1x1x16x256xi32>
    %166 = vector.shape_cast %165 : vector<1x1x16x256xi32> to vector<16x256xi32>
    %167 = vector.shape_cast %164 : vector<16x256xi32> to vector<1x1x16x256xi32>
    tpu.vector_store %arg5[%c0_77, %c7_78, %c0_79, %c0_80], %167 {strides = array<i32>} : memref<1x8x16x256xi32, #tpu.memory_space<vmem>>, vector<1x1x16x256xi32>,
    return
  }
  func.func @transform_0(%arg0: i32, %arg1: i32, %arg2: i32) -> (i32, i32) {
    %c0_i32 = arith.constant 0 : i32
    %c0_i32_0 = arith.constant 0 : i32
    %c0_i32_1 = arith.constant 0 : i32
    return %c0_i32, %c0_i32_0 : i32, i32
  }
  func.func @transform_1(%arg0: i32, %arg1: i32, %arg2: i32) -> (i32, i32, i32, i32) {
    %c0_i32 = arith.constant 0 : i32
    %c0_i32_0 = arith.constant 0 : i32
    return %arg0, %c0_i32, %arg1, %arg2 : i32, i32, i32, i32
  }
  func.func @transform_2(%arg0: i32, %arg1: i32, %arg2: i32) -> (i32, i32, i32, i32) {
    %c0_i32 = arith.constant 0 : i32
    %c0_i32_0 = arith.constant 0 : i32
    return %arg0, %c0_i32, %arg1, %arg2 : i32, i32, i32, i32
  }
  func.func @transform_3(%arg0: i32, %arg1: i32, %arg2: i32) -> (i32, i32, i32, i32) {
    %c0_i32 = arith.constant 0 : i32
    %c0_i32_0 = arith.constant 0 : i32
    return %arg0, %c0_i32, %arg1, %arg2 : i32, i32, i32, i32
  }
}

module attributes {stable_mosaic.version = 11 : i64} {
  func.func @_trilinear_raysum_kernel(%arg0: i32, %arg1: i32, %arg2: i32, %arg3: memref<1x8x16x256xbf16, #tpu.memory_space<vmem>>, %arg4: memref<1x3x16x256xf32, #tpu.memory_space<vmem>>, %arg5: memref<1x1x256xf32, #tpu.memory_space<vmem>>) attributes {dimension_semantics = [#tpu.dimension_semantics<parallel>, #tpu.dimension_semantics<parallel>, #tpu.dimension_semantics<arbitrary>], iteration_bounds = array<i64: 2, 1, 1>, scalar_prefetch = 0 : i64, scratch_operands = 0 : i64, tpu.core_type = #tpu.core_type<tc>, window_params = [{transform_indices = @transform_0, window_bounds = array<i64: 1, 8, 16, 256>}, {transform_indices = @transform_1, window_bounds = array<i64: 1, 3, 16, 256>}, {transform_indices = @transform_2, window_bounds = array<i64: 1, 1, 256>}]} {
    %c0 = arith.constant 0 : index
    %c0_0 = arith.constant 0 : index
    %c0_1 = arith.constant 0 : index
    %c0_2 = arith.constant 0 : index
    %0 = vector.load %arg4[%c0, %c0_0, %c0_1, %c0_2] : memref<1x3x16x256xf32, #tpu.memory_space<vmem>>, vector<1x1x16x256xf32>
    %1 = vector.shape_cast %0 : vector<1x1x16x256xf32> to vector<16x256xf32>
    %c0_3 = arith.constant 0 : index
    %c1 = arith.constant 1 : index
    %c0_4 = arith.constant 0 : index
    %c0_5 = arith.constant 0 : index
    %2 = vector.load %arg4[%c0_3, %c1, %c0_4, %c0_5] : memref<1x3x16x256xf32, #tpu.memory_space<vmem>>, vector<1x1x16x256xf32>
    %3 = vector.shape_cast %2 : vector<1x1x16x256xf32> to vector<16x256xf32>
    %c0_6 = arith.constant 0 : index
    %c2 = arith.constant 2 : index
    %c0_7 = arith.constant 0 : index
    %c0_8 = arith.constant 0 : index
    %4 = vector.load %arg4[%c0_6, %c2, %c0_7, %c0_8] : memref<1x3x16x256xf32, #tpu.memory_space<vmem>>, vector<1x1x16x256xf32>
    %5 = vector.shape_cast %4 : vector<1x1x16x256xf32> to vector<16x256xf32>
    %cst = arith.constant 1.000000e+00 : f32
    %6 = vector.broadcast %cst : f32 to vector<16x256xf32>
    %7 = arith.subf %6, %1 : vector<16x256xf32>
    %c0_9 = arith.constant 0 : index
    %c0_10 = arith.constant 0 : index
    %c0_11 = arith.constant 0 : index
    %c0_12 = arith.constant 0 : index
    %8 = vector.load %arg3[%c0_9, %c0_10, %c0_11, %c0_12] : memref<1x8x16x256xbf16, #tpu.memory_space<vmem>>, vector<1x1x16x256xbf16>
    %9 = vector.shape_cast %8 : vector<1x1x16x256xbf16> to vector<16x256xbf16>
    %10 = arith.extf %9 : vector<16x256xbf16> to vector<16x256xf32>
    %11 = arith.mulf %10, %7 : vector<16x256xf32>
    %c0_13 = arith.constant 0 : index
    %c1_14 = arith.constant 1 : index
    %c0_15 = arith.constant 0 : index
    %c0_16 = arith.constant 0 : index
    %12 = vector.load %arg3[%c0_13, %c1_14, %c0_15, %c0_16] : memref<1x8x16x256xbf16, #tpu.memory_space<vmem>>, vector<1x1x16x256xbf16>
    %13 = vector.shape_cast %12 : vector<1x1x16x256xbf16> to vector<16x256xbf16>
    %14 = arith.extf %13 : vector<16x256xbf16> to vector<16x256xf32>
    %15 = arith.mulf %14, %1 : vector<16x256xf32>
    %16 = arith.addf %11, %15 : vector<16x256xf32>
    %c0_17 = arith.constant 0 : index
    %c2_18 = arith.constant 2 : index
    %c0_19 = arith.constant 0 : index
    %c0_20 = arith.constant 0 : index
    %17 = vector.load %arg3[%c0_17, %c2_18, %c0_19, %c0_20] : memref<1x8x16x256xbf16, #tpu.memory_space<vmem>>, vector<1x1x16x256xbf16>
    %18 = vector.shape_cast %17 : vector<1x1x16x256xbf16> to vector<16x256xbf16>
    %19 = arith.extf %18 : vector<16x256xbf16> to vector<16x256xf32>
    %20 = arith.mulf %19, %7 : vector<16x256xf32>
    %c0_21 = arith.constant 0 : index
    %c3 = arith.constant 3 : index
    %c0_22 = arith.constant 0 : index
    %c0_23 = arith.constant 0 : index
    %21 = vector.load %arg3[%c0_21, %c3, %c0_22, %c0_23] : memref<1x8x16x256xbf16, #tpu.memory_space<vmem>>, vector<1x1x16x256xbf16>
    %22 = vector.shape_cast %21 : vector<1x1x16x256xbf16> to vector<16x256xbf16>
    %23 = arith.extf %22 : vector<16x256xbf16> to vector<16x256xf32>
    %24 = arith.mulf %23, %1 : vector<16x256xf32>
    %25 = arith.addf %20, %24 : vector<16x256xf32>
    %c0_24 = arith.constant 0 : index
    %c4 = arith.constant 4 : index
    %c0_25 = arith.constant 0 : index
    %c0_26 = arith.constant 0 : index
    %26 = vector.load %arg3[%c0_24, %c4, %c0_25, %c0_26] : memref<1x8x16x256xbf16, #tpu.memory_space<vmem>>, vector<1x1x16x256xbf16>
    %27 = vector.shape_cast %26 : vector<1x1x16x256xbf16> to vector<16x256xbf16>
    %28 = arith.extf %27 : vector<16x256xbf16> to vector<16x256xf32>
    %29 = arith.mulf %28, %7 : vector<16x256xf32>
    %c0_27 = arith.constant 0 : index
    %c5 = arith.constant 5 : index
    %c0_28 = arith.constant 0 : index
    %c0_29 = arith.constant 0 : index
    %30 = vector.load %arg3[%c0_27, %c5, %c0_28, %c0_29] : memref<1x8x16x256xbf16, #tpu.memory_space<vmem>>, vector<1x1x16x256xbf16>
    %31 = vector.shape_cast %30 : vector<1x1x16x256xbf16> to vector<16x256xbf16>
    %32 = arith.extf %31 : vector<16x256xbf16> to vector<16x256xf32>
    %33 = arith.mulf %32, %1 : vector<16x256xf32>
    %34 = arith.addf %29, %33 : vector<16x256xf32>
    %c0_30 = arith.constant 0 : index
    %c6 = arith.constant 6 : index
    %c0_31 = arith.constant 0 : index
    %c0_32 = arith.constant 0 : index
    %35 = vector.load %arg3[%c0_30, %c6, %c0_31, %c0_32] : memref<1x8x16x256xbf16, #tpu.memory_space<vmem>>, vector<1x1x16x256xbf16>
    %36 = vector.shape_cast %35 : vector<1x1x16x256xbf16> to vector<16x256xbf16>
    %37 = arith.extf %36 : vector<16x256xbf16> to vector<16x256xf32>
    %38 = arith.mulf %37, %7 : vector<16x256xf32>
    %c0_33 = arith.constant 0 : index
    %c7 = arith.constant 7 : index
    %c0_34 = arith.constant 0 : index
    %c0_35 = arith.constant 0 : index
    %39 = vector.load %arg3[%c0_33, %c7, %c0_34, %c0_35] : memref<1x8x16x256xbf16, #tpu.memory_space<vmem>>, vector<1x1x16x256xbf16>
    %40 = vector.shape_cast %39 : vector<1x1x16x256xbf16> to vector<16x256xbf16>
    %41 = arith.extf %40 : vector<16x256xbf16> to vector<16x256xf32>
    %42 = arith.mulf %41, %1 : vector<16x256xf32>
    %43 = arith.addf %38, %42 : vector<16x256xf32>
    %cst_36 = arith.constant 1.000000e+00 : f32
    %44 = vector.broadcast %cst_36 : f32 to vector<16x256xf32>
    %45 = arith.subf %44, %3 : vector<16x256xf32>
    %46 = arith.mulf %16, %45 : vector<16x256xf32>
    %47 = arith.mulf %25, %3 : vector<16x256xf32>
    %48 = arith.addf %46, %47 : vector<16x256xf32>
    %cst_37 = arith.constant 1.000000e+00 : f32
    %49 = vector.broadcast %cst_37 : f32 to vector<16x256xf32>
    %50 = arith.subf %49, %3 : vector<16x256xf32>
    %51 = arith.mulf %34, %50 : vector<16x256xf32>
    %52 = arith.mulf %43, %3 : vector<16x256xf32>
    %53 = arith.addf %51, %52 : vector<16x256xf32>
    %cst_38 = arith.constant 1.000000e+00 : f32
    %54 = vector.broadcast %cst_38 : f32 to vector<16x256xf32>
    %55 = arith.subf %54, %5 : vector<16x256xf32>
    %56 = arith.mulf %48, %55 : vector<16x256xf32>
    %57 = arith.mulf %53, %5 : vector<16x256xf32>
    %58 = arith.addf %56, %57 : vector<16x256xf32>
    %cst_39 = arith.constant dense<0.000000e+00> : vector<256xf32>
    %59 = vector.multi_reduction <add>, %58, %cst_39 [0] : vector<16x256xf32> to vector<256xf32>
    %60 = vector.shape_cast %59 : vector<256xf32> to vector<1x256xf32>
    %61 = vector.shape_cast %60 : vector<1x256xf32> to vector<1x1x256xf32>
    %c0_i32 = arith.constant 0 : i32
    %62 = arith.cmpi eq, %arg2, %c0_i32 : i32
    %63 = arith.extui %62 : i1 to i32
    %c0_i32_40 = arith.constant 0 : i32
    %64 = arith.cmpi ne, %63, %c0_i32_40 : i32
    scf.if %64 {
      %cst_47 = arith.constant 0.000000e+00 : f32
      %68 = vector.broadcast %cst_47 : f32 to vector<1x1x256xf32>
      %c0_48 = arith.constant 0 : index
      %c0_49 = arith.constant 0 : index
      %c0_50 = arith.constant 0 : index
      %69 = vector.load %arg5[%c0_48, %c0_49, %c0_50] : memref<1x1x256xf32, #tpu.memory_space<vmem>>, vector<1x1x256xf32>
      tpu.vector_store %arg5[%c0_48, %c0_49, %c0_50], %68 {strides = array<i32>} : memref<1x1x256xf32, #tpu.memory_space<vmem>>, vector<1x1x256xf32>,
    } else {
    }
    %c0_41 = arith.constant 0 : index
    %c0_42 = arith.constant 0 : index
    %c0_43 = arith.constant 0 : index
    %65 = vector.load %arg5[%c0_41, %c0_42, %c0_43] : memref<1x1x256xf32, #tpu.memory_space<vmem>>, vector<1x1x256xf32>
    %66 = arith.addf %65, %61 : vector<1x1x256xf32>
    %c0_44 = arith.constant 0 : index
    %c0_45 = arith.constant 0 : index
    %c0_46 = arith.constant 0 : index
    %67 = vector.load %arg5[%c0_44, %c0_45, %c0_46] : memref<1x1x256xf32, #tpu.memory_space<vmem>>, vector<1x1x256xf32>
    tpu.vector_store %arg5[%c0_44, %c0_45, %c0_46], %66 {strides = array<i32>} : memref<1x1x256xf32, #tpu.memory_space<vmem>>, vector<1x1x256xf32>,
    return
  }
  func.func @transform_0(%arg0: i32, %arg1: i32, %arg2: i32) -> (i32, i32, i32, i32) {
    %c0_i32 = arith.constant 0 : i32
    %c0_i32_0 = arith.constant 0 : i32
    return %arg0, %c0_i32, %arg2, %arg1 : i32, i32, i32, i32
  }
  func.func @transform_1(%arg0: i32, %arg1: i32, %arg2: i32) -> (i32, i32, i32, i32) {
    %c0_i32 = arith.constant 0 : i32
    %c0_i32_0 = arith.constant 0 : i32
    return %arg0, %c0_i32, %arg2, %arg1 : i32, i32, i32, i32
  }
  func.func @transform_2(%arg0: i32, %arg1: i32, %arg2: i32) -> (i32, i32, i32) {
    %c0_i32 = arith.constant 0 : i32
    %c0_i32_0 = arith.constant 0 : i32
    return %arg0, %c0_i32, %arg1 : i32, i32, i32
  }
}

</mosaic_0001>

<llo_original>
// kernel: sub.4
$region0: #{sub.4}
  #allocation0 [shape = 's32[1]{0}', space=sflag, size = 0x4, scoped, tag = 'scoped memory for sub.4']
  %s0 = inlined_call_operand.vmem [shape: f32[2], index: 0, kind: input, shape index: {}]
  %s1 = inlined_call_operand.vmem [shape: f32[2], index: 1, kind: input, shape index: {}]
  %s2 = inlined_call_operand.vmem [shape: f32[2], index: 2, kind: output, shape index: {}]
  %v3 = vld [vmem:[%s0] sm:$0x1]
  %v4 = vld [vmem:[%s1] sm:$0x1]
  %5 = xla_tuple %v3, %v4
  %6 = xla_tuple %5
  %v7 = vsub.f32 %v3, %v4
  %8 = xla_tuple %v7
  %9 = vst [vmem:[%s2] sm:$0x1] %v7

// kernel: squeeze.9
$region0: #{squeeze.9}
  %s0 = inlined_call_operand.vmem [shape: f32[2,256], index: 0, kind: input, shape index: {}]
  %s1 = inlined_call_operand.hbm [shape: f32[2,16,16], index: 1, kind: output, shape index: {}]
  $region1: #{squeeze.9} parent=0
    #allocation0 [shape = 'u8[16384]{0}', space=vmem, size = 0x4000, scoped, tag = 'operand span for operand 1']
    #allocation1 [shape = 's32[1]{0}', space=sflag, size = 0x4, scoped, tag = 'scoped memory for squeeze.9']
    #allocation2 [shape = 'u8[8192]{0}', space=vmem, size = 0x2000, scoped, tag = 'scoped mem for input reshape']
    %2 = vsyncpa [#allocation1], 0
    %s4 = sshll.u32 1, 2
    %s5 = ssub.s32 %s4, 1
    %s6 = scalar_lea.vmem %s0, 2
    %v7 = vld [vmem:[%s6] sm:%s5]
    %s8 = scalar_lea.vmem [#allocation2], 8
    %9 = vst [vmem:[%s8] sm:%s5] %v7
    %v10 = vld [vmem:[%s0] sm:%s5]
    %11 = vst [vmem:[#allocation2] sm:%s5] %v10
    %v12 = vld [vmem:[#allocation2] sm:$0x3]
    %vm13 = vcmask 130048
    %14 = vst.msk [vmem:[#allocation0] ss:$16 sm:$0x3] %vm13, %v12
    %s15 = scalar_lea.vmem [#allocation2], 8
    %v16 = vld [vmem:[%s15] sm:$0x3]
    %vm17 = vcmask 130048
    %s18 = scalar_lea.vmem [#allocation0], 8
    %19 = vst.msk [vmem:[%s18] ss:$16 sm:$0x3] %vm17, %v16
    %v20 = vld.sshfl [vmem:[#allocation2] sm:$0xff pattern:$0x99999180]
    %21 = vrot.lane.b32.xlu0 %v20, 112
    %v22 = vpop.permute.xlu0 %21
    %vm23 = vcmask 130048
    %s24 = scalar_lea.vmem [#allocation0], 1
    %25 = vst.msk [vmem:[%s24] ss:$8 sm:$0xf] %vm23, %v22
    %v26 = vld.sshfl [vmem:[#allocation2] sm:$0xff pattern:$0x99999180]
    %27 = vrot.lane.b32.xlu0 %v26, 96
    %v28 = vpop.permute.xlu0 %27
    %vm29 = vcmask 130048
    %s30 = scalar_lea.vmem [#allocation0], 2
    %31 = vst.msk [vmem:[%s30] ss:$8 sm:$0xf] %vm29, %v28
    %v32 = vld.sshfl [vmem:[#allocation2] sm:$0xff pattern:$0x99999180]
    %33 = vrot.lane.b32.xlu0 %v32, 80
    %v34 = vpop.permute.xlu0 %33
    %vm35 = vcmask 130048
    %s36 = scalar_lea.vmem [#allocation0], 3
    %37 = vst.msk [vmem:[%s36] ss:$8 sm:$0xf] %vm35, %v34
    %v38 = vld.sshfl [vmem:[#allocation2] sm:$0xff pattern:$0x99999180]
    %39 = vrot.lane.b32.xlu0 %v38, 64
    %v40 = vpop.permute.xlu0 %39
    %vm41 = vcmask 130048
    %s42 = scalar_lea.vmem [#allocation0], 4
    %43 = vst.msk [vmem:[%s42] ss:$8 sm:$0xf] %vm41, %v40
    %v44 = vld.sshfl [vmem:[#allocation2] sm:$0xff pattern:$0x99999180]
    %45 = vrot.lane.b32.xlu0 %v44, 48
    %v46 = vpop.permute.xlu0 %45
    %vm47 = vcmask 130048
    %s48 = scalar_lea.vmem [#allocation0], 5
    %49 = vst.msk [vmem:[%s48] ss:$8 sm:$0xf] %vm47, %v46
    %v50 = vld.sshfl [vmem:[#allocation2] sm:$0xff pattern:$0x99999180]
    %51 = vrot.lane.b32.xlu0 %v50, 32
    %v52 = vpop.permute.xlu0 %51
    %vm53 = vcmask 130048
    %s54 = scalar_lea.vmem [#allocation0], 6
    %55 = vst.msk [vmem:[%s54] ss:$8 sm:$0xf] %vm53, %v52
    %v56 = vld.sshfl [vmem:[#allocation2] sm:$0xff pattern:$0x99999180]
    %57 = vrot.lane.b32.xlu0 %v56, 16
    %v58 = vpop.permute.xlu0 %57
    %vm59 = vcmask 130048
    %s60 = scalar_lea.vmem [#allocation0], 7
    %61 = vst.msk [vmem:[%s60] ss:$8 sm:$0xf] %vm59, %v58
    %s63 = ssub.s32 512, 512
    %64 = vsyncadd [#allocation1], %s63
    %s66 = sshll.u32 [#allocation0], 4
    %s67 = int_to_ptr.vmem [resolvable:$true] %s66
    %69 = dma.vmem_to_hbm [thread:$0]  %s67, 512, %s1, [#allocation1]
    %70 = dma.done [#allocation1], 512
    %71 = vsyncpa [#allocation1], 1

// kernel: prost_forward.2
$region0: #{prost_forward.2}
  #allocation0 [shape = 'u32[]', space=smem, size = 0x4, offset = 0x4, fixed_abs, tag = 'smem constant byte address 0x4 - core index']
  #allocation1 [shape = 'u32[144,128]{1,0:T(1,128)}', space=vmem, size = 0x12000, scoped, tag = 'internal scratch']
  %s0 = inlined_call_operand.vmem [shape: f32[2,12], index: 0, kind: input, shape index: {}]
  %s1 = inlined_call_operand.vmem [shape: f32[2,4,16,256], index: 1, kind: input, shape index: {}]
  %s2 = inlined_call_operand.vmem [shape: s32[2,8,16,256], index: 2, kind: output, shape index: {0}]
  %s3 = inlined_call_operand.vmem [shape: f32[2,3,16,256], index: 3, kind: output, shape index: {1}]
  %4 = xla_tuple %s2, %s3
  %s5 = sld [smem:[#allocation0]]
  $region53: #{prost_forward.2} parent=0
    _
  %s7 = ssub.s32 1, %s5
  %s8 = scalar_select 0, %s7, %s5
  $region1: #{prost_forward.2} parent=0
    #allocation2 [shape = 'u8[1024]{0}', space=smem, size = 0x400, scoped, tag = 'input window, operand 0, single buffered']
    #allocation3 [shape = 's32[2]{0}', space=sflag, size = 0x8, scoped, tag = 'scoped memory for prost_forward.2']
    %9 = vsyncpa [#allocation3], 0
    loop: start=0, step=1, limit=4
    $region2: #{prost_forward.2} parent=1 // loop_pre_header
      _
    $region3: #{prost_forward.2} parent=1 // loop_header
      %s11 = sphi 0, %s15
      %p12 = scmp.ge.s32.totalorder %s11, 4
      %s18 = sphi 0, %s37
      %s19 = sphi 0, %s33
      %s20 = sphi 0, %s29
      %s21 = sphi 0, %s18
      %s22 = sphi 0, %s19
      %s23 = sphi 0, %s20
      %s24 = sphi 0, %s21
      %s25 = sphi 0, %s22
      %s26 = sphi 0, %s23
      %s38 = sphi 0, %s38
      %s40 = sphi 0, %s38
      %s41 = sphi 0, %s40
      %s55 = sphi 0, %s41
      %s65 = sphi 0, %s67
      %s68 = sphi 0, %s65
      %s69 = sphi 0, %s68
      %s85 = sphi 0, %s69
      %s95 = sphi 0, %s97
      %s98 = sphi 0, %s95
      %s99 = sphi 0, %s98
      %s115 = sphi 0, %s99
      %s125 = sphi 0, %s127
      %s128 = sphi 0, %s125
      %s129 = sphi 0, %s128
      %s145 = sphi 0, %s129
    $region4: #{prost_forward.2} parent=1 // loop_header_branch
      %14 = sbr.rel (%p12) target = $region8
    $region5: #{prost_forward.2} parent=1 // loop_body
      %s16 = ssub.s32 %s11, 1
      %s17 = ssub.s32 %s11, 2
      %s27 = sadd.s32 1, %s20
      %p28 = scmp.ge.s32.totalorder %s27, 1
      %s29 = scalar_select %p28, 0, %s27
      %s30 = sadd.s32 1, %s19
      %s31 = scalar_select %p28, %s30, %s19
      %p32 = scmp.ge.s32.totalorder %s31, 1
      %s33 = scalar_select %p32, 0, %s31
      %s34 = sadd.s32 1, %s18
      %s35 = scalar_select %p32, %s34, %s18
      %p36 = scmp.ge.s32.totalorder %s35, 2
      %s37 = scalar_select %p36, 0, %s35
      %s39 = sadd.s32 %s38, 1
      %p42 = scmp.eq.s32.totalorder %s11, 1
      %p43 = scmp.ne.s32.totalorder %s38, %s40
      %p44 = scmp.eq.s32.totalorder %s11, 0
      %p45 = por %p43, %p44
      %p46 = scmp.ne.s32.totalorder %s38, %s40
      %p47 = scmp.eq.s32.totalorder %s16, 1
      %p48 = por %p46, %p47
      %p49 = scmp.ne.s32.totalorder %s40, %s41
      %p50 = scmp.eq.s32.totalorder %s16, 0
      %p51 = por %p49, %p50
      %p52 = scmp.ne.s32.totalorder %s40, %s41
      %p53 = scmp.eq.s32.totalorder %s17, 1
      %p54 = por %p52, %p53
      %p56 = scmp.ne.s32.totalorder %s41, %s55
      %p57 = scmp.eq.s32.totalorder %s17, 0
      %p58 = por %p56, %p57
      %s59 = ssub.s32 %s18, %s37
      %s60 = ssub.s32 %s19, %s33
      %s61 = sor.u32 %s59, %s60
      %s62 = ssub.s32 %s20, %s29
      %s63 = sor.u32 %s61, %s62
      %p64 = scmp.eq.s32.totalorder %s63, 0
      %s66 = sadd.s32 %s65, 1
      %s67 = scalar_select %p64, %s65, %s66
      %p70 = pneg %p64
      %p71 = scmp.eq.s32.totalorder %s11, 1
      %p72 = por %p70, %p71
      %p73 = scmp.ne.s32.totalorder %s65, %s68
      %p74 = scmp.eq.s32.totalorder %s11, 0
      %p75 = por %p73, %p74
      %p76 = scmp.ne.s32.totalorder %s65, %s68
      %p77 = scmp.eq.s32.totalorder %s16, 1
      %p78 = por %p76, %p77
      %p79 = scmp.ne.s32.totalorder %s68, %s69
      %p80 = scmp.eq.s32.totalorder %s16, 0
      %p81 = por %p79, %p80
      %p82 = scmp.ne.s32.totalorder %s68, %s69
      %p83 = scmp.eq.s32.totalorder %s17, 1
      %p84 = por %p82, %p83
      %p86 = scmp.ne.s32.totalorder %s69, %s85
      %p87 = scmp.eq.s32.totalorder %s17, 0
      %p88 = por %p86, %p87
      %s89 = ssub.s32 %s18, %s37
      %s90 = ssub.s32 %s19, %s33
      %s91 = sor.u32 %s89, %s90
      %s92 = ssub.s32 %s20, %s29
      %s93 = sor.u32 %s91, %s92
      %p94 = scmp.eq.s32.totalorder %s93, 0
      %s96 = sadd.s32 %s95, 1
      %s97 = scalar_select %p94, %s95, %s96
      %p100 = pneg %p94
      %p101 = scmp.eq.s32.totalorder %s11, 1
      %p102 = por %p100, %p101
      %p103 = scmp.ne.s32.totalorder %s95, %s98
      %p104 = scmp.eq.s32.totalorder %s11, 0
      %p105 = por %p103, %p104
      %p106 = scmp.ne.s32.totalorder %s95, %s98
      %p107 = scmp.eq.s32.totalorder %s16, 1
      %p108 = por %p106, %p107
      %p109 = scmp.ne.s32.totalorder %s98, %s99
      %p110 = scmp.eq.s32.totalorder %s16, 0
      %p111 = por %p109, %p110
      %p112 = scmp.ne.s32.totalorder %s98, %s99
      %p113 = scmp.eq.s32.totalorder %s17, 1
      %p114 = por %p112, %p113
      %p116 = scmp.ne.s32.totalorder %s99, %s115
      %p117 = scmp.eq.s32.totalorder %s17, 0
      %p118 = por %p116, %p117
      %s119 = ssub.s32 %s18, %s37
      %s120 = ssub.s32 %s19, %s33
      %s121 = sor.u32 %s119, %s120
      %s122 = ssub.s32 %s20, %s29
      %s123 = sor.u32 %s121, %s122
      %p124 = scmp.eq.s32.totalorder %s123, 0
      %s126 = sadd.s32 %s125, 1
      %s127 = scalar_select %p124, %s125, %s126
      %p130 = pneg %p124
      %p131 = scmp.eq.s32.totalorder %s11, 1
      %p132 = por %p130, %p131
      %p133 = scmp.ne.s32.totalorder %s125, %s128
      %p134 = scmp.eq.s32.totalorder %s11, 0
      %p135 = por %p133, %p134
      %p136 = scmp.ne.s32.totalorder %s125, %s128
      %p137 = scmp.eq.s32.totalorder %s16, 1
      %p138 = por %p136, %p137
      %p139 = scmp.ne.s32.totalorder %s128, %s129
      %p140 = scmp.eq.s32.totalorder %s16, 0
      %p141 = por %p139, %p140
      %p142 = scmp.ne.s32.totalorder %s128, %s129
      %p143 = scmp.eq.s32.totalorder %s17, 1
      %p144 = por %p142, %p143
      %p146 = scmp.ne.s32.totalorder %s129, %s145
      %p147 = scmp.eq.s32.totalorder %s17, 0
      %p148 = por %p146, %p147
      %p149 = scmp.le.s32.totalorder 1, %s11
      %p150 = scmp.lt.s32.totalorder %s11, 3
      %p151 = pnand %p149, %p150
      %p152 = pneg %p151
      // Predicated region
      $region9: #{prost_forward.2} parent=5 // pred_check
        _
      $region10: #{prost_forward.2} parent=5 // pred_check_branch
        %154 = sbr.rel (%p151) target = $region12
      $region11: #{prost_forward.2} parent=5 // pred_region
        %s155 = ssub.s32 %s11, 1
        // Predicated region
        $region13: #{prost_forward.2} parent=11 // pred_check
          %p156 = pneg %p51
        $region14: #{prost_forward.2} parent=11 // pred_check_branch
          %158 = sbr.rel (%p156) target = $region16
        $region15: #{prost_forward.2} parent=11 // pred_region
          %s160 = ssub.s32 32, 32
          %161 = vsyncadd [#allocation3], %s160
          %s163 = sshll.u32 %s0, 4
          %s164 = int_to_ptr.vmem [resolvable:$true] %s163
          %166 = dma.vmem_to_smem %s164, 32, [#allocation2], [#allocation3]
        $region16: #{prost_forward.2} parent=11 // pred_fallthru
          _
      $region12: #{prost_forward.2} parent=5 // pred_fallthru
        _
      %p167 = scmp.lt.s32.totalorder %s11, 2
      // Predicated region
      $region17: #{prost_forward.2} parent=5 // pred_check
        %p168 = pneg %p167
      $region18: #{prost_forward.2} parent=5 // pred_check_branch
        %170 = sbr.rel (%p168) target = $region20
      $region19: #{prost_forward.2} parent=5 // pred_region
        // Predicated region
        $region21: #{prost_forward.2} parent=19 // pred_check
          %p171 = pneg %p75
        $region22: #{prost_forward.2} parent=19 // pred_check_branch
          %173 = sbr.rel (%p171) target = $region24
        $region23: #{prost_forward.2} parent=19 // pred_region
          %s174 = smul.u32 2, %s19
          %s175 = smul.u32 2, %s20
          %p176 = scmp.lt.s32.totalorder %s18, 1
          %s177 = scalar_select %p176, %s18, 1
          %p178 = scmp.lt.s32.totalorder %s174, 1
          %s179 = scalar_select %p178, %s174, 1
          %p180 = scmp.lt.s32.totalorder %s175, 1
          %s181 = scalar_select %p180, %s175, 1
          %s182 = smul.addr %s179, 2
          %s183 = sadd.s32 %s181, %s182
          %s184 = smul.addr %s177, 16
          %s185 = sadd.s32 %s183, %s184
          %s186 = smul.addr %s185, 8
          %s187 = scalar_lea.vmem %s1, %s186
          %s188 = smul.u32 2, %s19
          %s189 = smul.u32 2, %s20
        $region24: #{prost_forward.2} parent=19 // pred_fallthru
          _
      $region20: #{prost_forward.2} parent=5 // pred_fallthru
        _
      %p190 = scmp.le.s32.totalorder 1, %s11
      %p191 = scmp.lt.s32.totalorder %s11, 3
      %p192 = pnand %p190, %p191
      %p193 = pneg %p192
      // Predicated region
      $region25: #{prost_forward.2} parent=5 // pred_check
        _
      $region26: #{prost_forward.2} parent=5 // pred_check_branch
        %195 = sbr.rel (%p192) target = $region28
      $region27: #{prost_forward.2} parent=5 // pred_region
        %s196 = ssub.s32 %s11, 1
        // Predicated region
        $region29: #{prost_forward.2} parent=27 // pred_check
          %p197 = pneg %p51
        $region30: #{prost_forward.2} parent=27 // pred_check_branch
          %199 = sbr.rel (%p197) target = $region32
        $region31: #{prost_forward.2} parent=27 // pred_region
          %200 = dma.done [#allocation3], 32
        $region32: #{prost_forward.2} parent=27 // pred_fallthru
          _
        %201 = sfence
        %p202 = pneg %p51
        %p203 = pneg %p48
        %s204 = smul.u32 2, %s22
        %s205 = smul.u32 2, %s23
        %p206 = scmp.lt.s32.totalorder %s21, 1
        %s207 = scalar_select %p206, %s21, 1
        %p208 = scmp.lt.s32.totalorder %s204, 1
        %s209 = scalar_select %p208, %s204, 1
        %p210 = scmp.lt.s32.totalorder %s205, 1
        %s211 = scalar_select %p210, %s205, 1
        %s212 = smul.addr %s209, 2
        %s213 = sadd.s32 %s211, %s212
        %s214 = smul.addr %s207, 16
        %s215 = sadd.s32 %s213, %s214
        %s216 = smul.addr %s215, 8
        %s217 = scalar_lea.vmem %s1, %s216
        %p218 = pneg %p81
        %p219 = pneg %p78
        %p220 = pneg %p111
        %p221 = pneg %p108
        %s222 = smul.u32 2, %s22
        %s223 = smul.u32 2, %s23
        %p224 = scmp.lt.s32.totalorder %s21, 1
        %s225 = scalar_select %p224, %s21, 1
        %p226 = scmp.lt.s32.totalorder %s222, 1
        %s227 = scalar_select %p226, %s222, 1
        %p228 = scmp.lt.s32.totalorder %s223, 1
        %s229 = scalar_select %p228, %s223, 1
        %s230 = smul.addr %s227, 2
        %s231 = sadd.s32 %s229, %s230
        %s232 = smul.addr %s225, 32
        %s233 = sadd.s32 %s231, %s232
        %s234 = smul.addr %s233, 8
        %s235 = scalar_lea.vmem %s2, %s234
        %p236 = pneg %p141
        %p237 = pneg %p138
        %s238 = smul.u32 2, %s22
        %s239 = smul.u32 2, %s23
        %p240 = scmp.lt.s32.totalorder %s21, 1
        %s241 = scalar_select %p240, %s21, 1
        %p242 = scmp.lt.s32.totalorder %s238, 1
        %s243 = scalar_select %p242, %s238, 1
        %p244 = scmp.lt.s32.totalorder %s239, 1
        %s245 = scalar_select %p244, %s239, 1
        %s246 = smul.addr %s243, 2
        %s247 = sadd.s32 %s245, %s246
        %s248 = smul.addr %s241, 12
        %s249 = sadd.s32 %s247, %s248
        %s250 = smul.addr %s249, 8
        %s251 = scalar_lea.vmem %s3, %s250
        %s252 = smul.u32 2, %s22
        %s253 = smul.u32 2, %s23
        %p254 = scmp.lt.s32.totalorder %s21, 1
        %s255 = scalar_select %p254, %s21, 1
        %p256 = scmp.lt.s32.totalorder %s252, 1
        %s257 = scalar_select %p256, %s252, 1
        %p258 = scmp.lt.s32.totalorder %s253, 1
        %s259 = scalar_select %p258, %s253, 1
        %s260 = smul.addr %s257, 2
        %s261 = sadd.s32 %s259, %s260
        %s262 = smul.addr %s255, 16
        %s263 = sadd.s32 %s261, %s262
        %s264 = smul.addr %s263, 8
        %s265 = scalar_lea.vmem %s1, %s264
        %s266 = smul.u32 2, %s22
        %s267 = smul.u32 2, %s23
        %s268 = smul.u32 2, %s22
        %s269 = smul.u32 2, %s23
        %p270 = scmp.lt.s32.totalorder %s21, 1
        %s271 = scalar_select %p270, %s21, 1
        %p272 = scmp.lt.s32.totalorder %s268, 1
        %s273 = scalar_select %p272, %s268, 1
        %p274 = scmp.lt.s32.totalorder %s269, 1
        %s275 = scalar_select %p274, %s269, 1
        %s276 = smul.addr %s273, 2
        %s277 = sadd.s32 %s275, %s276
        %s278 = smul.addr %s271, 32
        %s279 = sadd.s32 %s277, %s278
        %s280 = smul.addr %s279, 8
        %s281 = scalar_lea.vmem %s2, %s280
        %s282 = smul.u32 2, %s22
        %s283 = smul.u32 2, %s23
        %s284 = smul.u32 2, %s22
        %s285 = smul.u32 2, %s23
        %p286 = scmp.lt.s32.totalorder %s21, 1
        %s287 = scalar_select %p286, %s21, 1
        %p288 = scmp.lt.s32.totalorder %s284, 1
        %s289 = scalar_select %p288, %s284, 1
        %p290 = scmp.lt.s32.totalorder %s285, 1
        %s291 = scalar_select %p290, %s285, 1
        %s292 = smul.addr %s289, 2
        %s293 = sadd.s32 %s291, %s292
        %s294 = smul.addr %s287, 12
        %s295 = sadd.s32 %s293, %s294
        %s296 = smul.addr %s295, 8
        %s297 = scalar_lea.vmem %s3, %s296
        %s298 = smul.u32 2, %s22
        %s299 = smul.u32 2, %s23
        %v300 = vld [vmem:[%s265] sm:$0xff]
        %v301 = vld [vmem:[%s265 + $0x8] sm:$0xff]
        %v302 = vld [vmem:[%s265 + $0x10] sm:$0xff]
        %v303 = vld [vmem:[%s265 + $0x18] sm:$0xff]
        %s304 = scalar_lea.vmem %s265, 32
        %v305 = vld [vmem:[%s304] sm:$0xff]
        %v306 = vld [vmem:[%s304 + $0x8] sm:$0xff]
        %v307 = vld [vmem:[%s304 + $0x10] sm:$0xff]
        %v308 = vld [vmem:[%s304 + $0x18] sm:$0xff]
        %s309 = scalar_lea.vmem %s265, 64
        %v310 = vld [vmem:[%s309] sm:$0xff]
        %v311 = vld [vmem:[%s309 + $0x8] sm:$0xff]
        %v312 = vld [vmem:[%s309 + $0x10] sm:$0xff]
        %v313 = vld [vmem:[%s309 + $0x18] sm:$0xff]
        %s314 = scalar_lea.vmem %s265, 96
        %v315 = vld [vmem:[%s314] sm:$0xff]
        %v316 = vld [vmem:[%s314 + $0x8] sm:$0xff]
        %v317 = vld [vmem:[%s314 + $0x10] sm:$0xff]
        %v318 = vld [vmem:[%s314 + $0x18] sm:$0xff]
        %s319 = smul.u32 %s21, 128
        %s320 = sld [smem:[#allocation2 + %s319]]
        %v321 = vstv %s320
        %v322 = vmul.f32 %v321, %v300
        %v323 = vmul.f32 %v321, %v301
        %v324 = vmul.f32 %v321, %v302
        %v325 = vmul.f32 %v321, %v303
        %s326 = sadd.s32 %s319, 1
        %s327 = sld [smem:[#allocation2 + %s326]]
        %v328 = vstv %s327
        %v329 = vmul.f32 %v328, %v305
        %v330 = vmul.f32 %v328, %v306
        %v331 = vmul.f32 %v328, %v307
        %v332 = vmul.f32 %v328, %v308
        %v333 = vadd.f32 %v322, %v329
        %v334 = vadd.f32 %v323, %v330
        %v335 = vadd.f32 %v324, %v331
        %v336 = vadd.f32 %v325, %v332
        %s337 = sadd.s32 %s319, 2
        %s338 = sld [smem:[#allocation2 + %s337]]
        %v339 = vstv %s338
        %v340 = vmul.f32 %v339, %v310
        %v341 = vmul.f32 %v339, %v311
        %v342 = vmul.f32 %v339, %v312
        %v343 = vmul.f32 %v339, %v313
        %v344 = vadd.f32 %v333, %v340
        %v345 = vadd.f32 %v334, %v341
        %v346 = vadd.f32 %v335, %v342
        %v347 = vadd.f32 %v336, %v343
        %s348 = sadd.s32 %s319, 3
        %s349 = sld [smem:[#allocation2 + %s348]]
        %v350 = vstv %s349
        %v351 = vmul.f32 %v350, %v315
        %v352 = vmul.f32 %v350, %v316
        %v353 = vmul.f32 %v350, %v317
        %v354 = vmul.f32 %v350, %v318
        %v355 = vadd.f32 %v344, %v351
        %v356 = vadd.f32 %v345, %v352
        %v357 = vadd.f32 %v346, %v353
        %v358 = vadd.f32 %v347, %v354
        %v359 = vfloor.f32 %v355
        %v360 = vfloor.f32 %v356
        %v361 = vfloor.f32 %v357
        %v362 = vfloor.f32 %v358
        %v363 = vmax.f32 %v359, 0.0
        %v364 = vmax.f32 %v360, 0.0
        %v365 = vmax.f32 %v361, 0.0
        %v366 = vmax.f32 %v362, 0.0
        %v367 = vmin.f32 %v363, 15.0
        %v368 = vmin.f32 %v364, 15.0
        %v369 = vmin.f32 %v365, 15.0
        %v370 = vmin.f32 %v366, 15.0
        %v371 = vcvt.f32.s32.to.zero.pseudo %v367
        %v372 = vcvt.f32.s32.to.zero.pseudo %v368
        %v373 = vcvt.f32.s32.to.zero.pseudo %v369
        %v374 = vcvt.f32.s32.to.zero.pseudo %v370
        %v375 = vadd.f32 %v359, 1.0
        %v376 = vadd.f32 %v360, 1.0
        %v377 = vadd.f32 %v361, 1.0
        %v378 = vadd.f32 %v362, 1.0
        %v379 = vmax.f32 %v375, 0.0
        %v380 = vmax.f32 %v376, 0.0
        %v381 = vmax.f32 %v377, 0.0
        %v382 = vmax.f32 %v378, 0.0
        %v383 = vmin.f32 %v379, 15.0
        %v384 = vmin.f32 %v380, 15.0
        %v385 = vmin.f32 %v381, 15.0
        %v386 = vmin.f32 %v382, 15.0
        %v387 = vcvt.f32.s32.to.zero.pseudo %v383
        %v388 = vcvt.f32.s32.to.zero.pseudo %v384
        %v389 = vcvt.f32.s32.to.zero.pseudo %v385
        %v390 = vcvt.f32.s32.to.zero.pseudo %v386
        %v391 = vsub.f32 %v355, %v359
        %v392 = vsub.f32 %v356, %v360
        %v393 = vsub.f32 %v357, %v361
        %v394 = vsub.f32 %v358, %v362
        %s395 = sadd.s32 %s319, 4
        %s396 = sld [smem:[#allocation2 + %s395]]
        %v397 = vstv %s396
        %v398 = vmul.f32 %v397, %v300
        %v399 = vmul.f32 %v397, %v301
        %v400 = vmul.f32 %v397, %v302
        %v401 = vmul.f32 %v397, %v303
        %s402 = sadd.s32 %s319, 5
        %s403 = sld [smem:[#allocation2 + %s402]]
        %v404 = vstv %s403
        %v405 = vmul.f32 %v404, %v305
        %v406 = vmul.f32 %v404, %v306
        %v407 = vmul.f32 %v404, %v307
        %v408 = vmul.f32 %v404, %v308
        %v409 = vadd.f32 %v398, %v405
        %v410 = vadd.f32 %v399, %v406
        %v411 = vadd.f32 %v400, %v407
        %v412 = vadd.f32 %v401, %v408
        %s413 = sadd.s32 %s319, 6
        %s414 = sld [smem:[#allocation2 + %s413]]
        %v415 = vstv %s414
        %v416 = vmul.f32 %v415, %v310
        %v417 = vmul.f32 %v415, %v311
        %v418 = vmul.f32 %v415, %v312
        %v419 = vmul.f32 %v415, %v313
        %v420 = vadd.f32 %v409, %v416
        %v421 = vadd.f32 %v410, %v417
        %v422 = vadd.f32 %v411, %v418
        %v423 = vadd.f32 %v412, %v419
        %s424 = sadd.s32 %s319, 7
        %s425 = sld [smem:[#allocation2 + %s424]]
        %v426 = vstv %s425
        %v427 = vmul.f32 %v426, %v315
        %v428 = vmul.f32 %v426, %v316
        %v429 = vmul.f32 %v426, %v317
        %v430 = vmul.f32 %v426, %v318
        %v431 = vadd.f32 %v420, %v427
        %v432 = vadd.f32 %v421, %v428
        %v433 = vadd.f32 %v422, %v429
        %v434 = vadd.f32 %v423, %v430
        %v435 = vfloor.f32 %v431
        %v436 = vfloor.f32 %v432
        %v437 = vfloor.f32 %v433
        %v438 = vfloor.f32 %v434
        %v439 = vmax.f32 %v435, 0.0
        %v440 = vmax.f32 %v436, 0.0
        %v441 = vmax.f32 %v437, 0.0
        %v442 = vmax.f32 %v438, 0.0
        %v443 = vmin.f32 %v439, 15.0
        %v444 = vmin.f32 %v440, 15.0
        %v445 = vmin.f32 %v441, 15.0
        %v446 = vmin.f32 %v442, 15.0
        %v447 = vcvt.f32.s32.to.zero.pseudo %v443
        %v448 = vcvt.f32.s32.to.zero.pseudo %v444
        %v449 = vcvt.f32.s32.to.zero.pseudo %v445
        %v450 = vcvt.f32.s32.to.zero.pseudo %v446
        %v451 = vadd.f32 %v435, 1.0
        %v452 = vadd.f32 %v436, 1.0
        %v453 = vadd.f32 %v437, 1.0
        %v454 = vadd.f32 %v438, 1.0
        %v455 = vmax.f32 %v451, 0.0
        %v456 = vmax.f32 %v452, 0.0
        %v457 = vmax.f32 %v453, 0.0
        %v458 = vmax.f32 %v454, 0.0
        %v459 = vmin.f32 %v455, 15.0
        %v460 = vmin.f32 %v456, 15.0
        %v461 = vmin.f32 %v457, 15.0
        %v462 = vmin.f32 %v458, 15.0
        %v463 = vcvt.f32.s32.to.zero.pseudo %v459
        %v464 = vcvt.f32.s32.to.zero.pseudo %v460
        %v465 = vcvt.f32.s32.to.zero.pseudo %v461
        %v466 = vcvt.f32.s32.to.zero.pseudo %v462
        %v467 = vsub.f32 %v431, %v435
        %v468 = vsub.f32 %v432, %v436
        %v469 = vsub.f32 %v433, %v437
        %v470 = vsub.f32 %v434, %v438
        %s471 = sadd.s32 %s319, 8
        %s472 = sld [smem:[#allocation2 + %s471]]
        %v473 = vstv %s472
        %v474 = vmul.f32 %v473, %v300
        %v475 = vmul.f32 %v473, %v301
        %v476 = vmul.f32 %v473, %v302
        %v477 = vmul.f32 %v473, %v303
        %s478 = sadd.s32 %s319, 9
        %s479 = sld [smem:[#allocation2 + %s478]]
        %v480 = vstv %s479
        %v481 = vmul.f32 %v480, %v305
        %v482 = vmul.f32 %v480, %v306
        %v483 = vmul.f32 %v480, %v307
        %v484 = vmul.f32 %v480, %v308
        %v485 = vadd.f32 %v474, %v481
        %v486 = vadd.f32 %v475, %v482
        %v487 = vadd.f32 %v476, %v483
        %v488 = vadd.f32 %v477, %v484
        %s489 = sadd.s32 %s319, 10
        %s490 = sld [smem:[#allocation2 + %s489]]
        %v491 = vstv %s490
        %v492 = vmul.f32 %v491, %v310
        %v493 = vmul.f32 %v491, %v311
        %v494 = vmul.f32 %v491, %v312
        %v495 = vmul.f32 %v491, %v313
        %v496 = vadd.f32 %v485, %v492
        %v497 = vadd.f32 %v486, %v493
        %v498 = vadd.f32 %v487, %v494
        %v499 = vadd.f32 %v488, %v495
        %s500 = sadd.s32 %s319, 11
        %s501 = sld [smem:[#allocation2 + %s500]]
        %v502 = vstv %s501
        %v503 = vmul.f32 %v502, %v315
        %v504 = vmul.f32 %v502, %v316
        %v505 = vmul.f32 %v502, %v317
        %v506 = vmul.f32 %v502, %v318
        %v507 = vadd.f32 %v496, %v503
        %v508 = vadd.f32 %v497, %v504
        %v509 = vadd.f32 %v498, %v505
        %v510 = vadd.f32 %v499, %v506
        %v511 = vfloor.f32 %v507
        %v512 = vfloor.f32 %v508
        %v513 = vfloor.f32 %v509
        %v514 = vfloor.f32 %v510
        %v515 = vmax.f32 %v511, 0.0
        %v516 = vmax.f32 %v512, 0.0
        %v517 = vmax.f32 %v513, 0.0
        %v518 = vmax.f32 %v514, 0.0
        %v519 = vmin.f32 %v515, 15.0
        %v520 = vmin.f32 %v516, 15.0
        %v521 = vmin.f32 %v517, 15.0
        %v522 = vmin.f32 %v518, 15.0
        %v523 = vcvt.f32.s32.to.zero.pseudo %v519
        %v524 = vcvt.f32.s32.to.zero.pseudo %v520
        %v525 = vcvt.f32.s32.to.zero.pseudo %v521
        %v526 = vcvt.f32.s32.to.zero.pseudo %v522
        %v527 = vadd.f32 %v511, 1.0
        %v528 = vadd.f32 %v512, 1.0
        %v529 = vadd.f32 %v513, 1.0
        %v530 = vadd.f32 %v514, 1.0
        %v531 = vmax.f32 %v527, 0.0
        %v532 = vmax.f32 %v528, 0.0
        %v533 = vmax.f32 %v529, 0.0
        %v534 = vmax.f32 %v530, 0.0
        %v535 = vmin.f32 %v531, 15.0
        %v536 = vmin.f32 %v532, 15.0
        %v537 = vmin.f32 %v533, 15.0
        %v538 = vmin.f32 %v534, 15.0
        %v539 = vcvt.f32.s32.to.zero.pseudo %v535
        %v540 = vcvt.f32.s32.to.zero.pseudo %v536
        %v541 = vcvt.f32.s32.to.zero.pseudo %v537
        %v542 = vcvt.f32.s32.to.zero.pseudo %v538
        %v543 = vsub.f32 %v507, %v511
        %v544 = vsub.f32 %v508, %v512
        %v545 = vsub.f32 %v509, %v513
        %v546 = vsub.f32 %v510, %v514
        %547 = vst [vmem:[%s297] sm:$0xff] %v391
        %548 = vst [vmem:[%s297 + $0x8] sm:$0xff] %v392
        %549 = vst [vmem:[%s297 + $0x10] sm:$0xff] %v393
        %550 = vst [vmem:[%s297 + $0x18] sm:$0xff] %v394
        %s551 = scalar_lea.vmem %s297, 32
        %552 = vst [vmem:[%s551] sm:$0xff] %v467
        %553 = vst [vmem:[%s551 + $0x8] sm:$0xff] %v468
        %554 = vst [vmem:[%s551 + $0x10] sm:$0xff] %v469
        %555 = vst [vmem:[%s551 + $0x18] sm:$0xff] %v470
        %s556 = scalar_lea.vmem %s297, 64
        %557 = vst [vmem:[%s556] sm:$0xff] %v543
        %558 = vst [vmem:[%s556 + $0x8] sm:$0xff] %v544
        %559 = vst [vmem:[%s556 + $0x10] sm:$0xff] %v545
        %560 = vst [vmem:[%s556 + $0x18] sm:$0xff] %v546
        %v561 = vmul.u32 %v523, 16
        %v562 = vmul.u32 %v524, 16
        %v563 = vmul.u32 %v525, 16
        %v564 = vmul.u32 %v526, 16
        %v565 = vadd.s32 %v561, %v447
        %v566 = vadd.s32 %v562, %v448
        %v567 = vadd.s32 %v563, %v449
        %v568 = vadd.s32 %v564, %v450
        %v569 = vmul.u32 %v565, 16
        %v570 = vmul.u32 %v566, 16
        %v571 = vmul.u32 %v567, 16
        %v572 = vmul.u32 %v568, 16
        %v573 = vadd.s32 %v561, %v463
        %v574 = vadd.s32 %v562, %v464
        %v575 = vadd.s32 %v563, %v465
        %v576 = vadd.s32 %v564, %v466
        %v577 = vmul.u32 %v573, 16
        %v578 = vmul.u32 %v574, 16
        %v579 = vmul.u32 %v575, 16
        %v580 = vmul.u32 %v576, 16
        %v581 = vmul.u32 %v539, 16
        %v582 = vmul.u32 %v540, 16
        %v583 = vmul.u32 %v541, 16
        %v584 = vmul.u32 %v542, 16
        %v585 = vadd.s32 %v581, %v447
        %v586 = vadd.s32 %v582, %v448
        %v587 = vadd.s32 %v583, %v449
        %v588 = vadd.s32 %v584, %v450
        %v589 = vmul.u32 %v585, 16
        %v590 = vmul.u32 %v586, 16
        %v591 = vmul.u32 %v587, 16
        %v592 = vmul.u32 %v588, 16
        %v593 = vadd.s32 %v581, %v463
        %v594 = vadd.s32 %v582, %v464
        %v595 = vadd.s32 %v583, %v465
        %v596 = vadd.s32 %v584, %v466
        %v597 = vmul.u32 %v593, 16
        %v598 = vmul.u32 %v594, 16
        %v599 = vmul.u32 %v595, 16
        %v600 = vmul.u32 %v596, 16
        %v601 = vadd.s32 %v569, %v371
        %v602 = vadd.s32 %v570, %v372
        %v603 = vadd.s32 %v571, %v373
        %v604 = vadd.s32 %v572, %v374
        %605 = vst [vmem:[%s281] sm:$0xff] %v601
        %606 = vst [vmem:[%s281 + $0x8] sm:$0xff] %v602
        %607 = vst [vmem:[%s281 + $0x10] sm:$0xff] %v603
        %608 = vst [vmem:[%s281 + $0x18] sm:$0xff] %v604
        %v609 = vadd.s32 %v569, %v387
        %v610 = vadd.s32 %v570, %v388
        %v611 = vadd.s32 %v571, %v389
        %v612 = vadd.s32 %v572, %v390
        %s613 = scalar_lea.vmem %s281, 32
        %614 = vst [vmem:[%s613] sm:$0xff] %v609
        %615 = vst [vmem:[%s613 + $0x8] sm:$0xff] %v610
        %616 = vst [vmem:[%s613 + $0x10] sm:$0xff] %v611
        %617 = vst [vmem:[%s613 + $0x18] sm:$0xff] %v612
        %v618 = vadd.s32 %v577, %v371
        %v619 = vadd.s32 %v578, %v372
        %v620 = vadd.s32 %v579, %v373
        %v621 = vadd.s32 %v580, %v374
        %s622 = scalar_lea.vmem %s281, 64
        %623 = vst [vmem:[%s622] sm:$0xff] %v618
        %624 = vst [vmem:[%s622 + $0x8] sm:$0xff] %v619
        %625 = vst [vmem:[%s622 + $0x10] sm:$0xff] %v620
        %626 = vst [vmem:[%s622 + $0x18] sm:$0xff] %v621
        %v627 = vadd.s32 %v577, %v387
        %v628 = vadd.s32 %v578, %v388
        %v629 = vadd.s32 %v579, %v389
        %v630 = vadd.s32 %v580, %v390
        %s631 = scalar_lea.vmem %s281, 96
        %632 = vst [vmem:[%s631] sm:$0xff] %v627
        %633 = vst [vmem:[%s631 + $0x8] sm:$0xff] %v628
        %634 = vst [vmem:[%s631 + $0x10] sm:$0xff] %v629
        %635 = vst [vmem:[%s631 + $0x18] sm:$0xff] %v630
        %v636 = vadd.s32 %v589, %v371
        %v637 = vadd.s32 %v590, %v372
        %v638 = vadd.s32 %v591, %v373
        %v639 = vadd.s32 %v592, %v374
        %s640 = scalar_lea.vmem %s281, 128
        %641 = vst [vmem:[%s640] sm:$0xff] %v636
        %642 = vst [vmem:[%s640 + $0x8] sm:$0xff] %v637
        %643 = vst [vmem:[%s640 + $0x10] sm:$0xff] %v638
        %644 = vst [vmem:[%s640 + $0x18] sm:$0xff] %v639
        %v645 = vadd.s32 %v589, %v387
        %v646 = vadd.s32 %v590, %v388
        %v647 = vadd.s32 %v591, %v389
        %v648 = vadd.s32 %v592, %v390
        %s649 = scalar_lea.vmem %s281, 160
        %650 = vst [vmem:[%s649] sm:$0xff] %v645
        %651 = vst [vmem:[%s649 + $0x8] sm:$0xff] %v646
        %652 = vst [vmem:[%s649 + $0x10] sm:$0xff] %v647
        %653 = vst [vmem:[%s649 + $0x18] sm:$0xff] %v648
        %v654 = vadd.s32 %v597, %v371
        %v655 = vadd.s32 %v598, %v372
        %v656 = vadd.s32 %v599, %v373
        %v657 = vadd.s32 %v600, %v374
        %s658 = scalar_lea.vmem %s281, 192
        %659 = vst [vmem:[%s658] sm:$0xff] %v654
        %660 = vst [vmem:[%s658 + $0x8] sm:$0xff] %v655
        %661 = vst [vmem:[%s658 + $0x10] sm:$0xff] %v656
        %662 = vst [vmem:[%s658 + $0x18] sm:$0xff] %v657
        %v663 = vadd.s32 %v597, %v387
        %v664 = vadd.s32 %v598, %v388
        %v665 = vadd.s32 %v599, %v389
        %v666 = vadd.s32 %v600, %v390
        %s667 = scalar_lea.vmem %s281, 224
        %668 = vst [vmem:[%s667] sm:$0xff] %v663
        %669 = vst [vmem:[%s667 + $0x8] sm:$0xff] %v664
        %670 = vst [vmem:[%s667 + $0x10] sm:$0xff] %v665
        %671 = vst [vmem:[%s667 + $0x18] sm:$0xff] %v666
        %s672 = smul.u32 2, %s22
        %s673 = smul.u32 2, %s23
        %p674 = scmp.lt.s32.totalorder %s21, 1
        %s675 = scalar_select %p674, %s21, 1
        %p676 = scmp.lt.s32.totalorder %s672, 1
        %s677 = scalar_select %p676, %s672, 1
        %p678 = scmp.lt.s32.totalorder %s673, 1
        %s679 = scalar_select %p678, %s673, 1
        %s680 = smul.addr %s677, 2
        %s681 = sadd.s32 %s679, %s680
        %s682 = smul.addr %s675, 32
        %s683 = sadd.s32 %s681, %s682
        %s684 = smul.addr %s683, 8
        %s685 = scalar_lea.vmem %s2, %s684
        %s686 = smul.u32 2, %s22
        %s687 = smul.u32 2, %s23
        %p688 = scmp.lt.s32.totalorder %s21, 1
        %s689 = scalar_select %p688, %s21, 1
        %p690 = scmp.lt.s32.totalorder %s686, 1
        %s691 = scalar_select %p690, %s686, 1
        %p692 = scmp.lt.s32.totalorder %s687, 1
        %s693 = scalar_select %p692, %s687, 1
        %s694 = smul.addr %s691, 2
        %s695 = sadd.s32 %s693, %s694
        %s696 = smul.addr %s689, 12
        %s697 = sadd.s32 %s695, %s696
        %s698 = smul.addr %s697, 8
        %s699 = scalar_lea.vmem %s3, %s698
        // Predicated region
        $region33: #{prost_forward.2} parent=27 // pred_check
          %p700 = pneg %p108
        $region34: #{prost_forward.2} parent=27 // pred_check_branch
          %702 = sbr.rel (%p700) target = $region36
        $region35: #{prost_forward.2} parent=27 // pred_region
          %s703 = smul.u32 2, %s22
          %s704 = smul.u32 2, %s23
        $region36: #{prost_forward.2} parent=27 // pred_fallthru
          _
        // Predicated region
        $region37: #{prost_forward.2} parent=27 // pred_check
          %p705 = pneg %p138
        $region38: #{prost_forward.2} parent=27 // pred_check_branch
          %707 = sbr.rel (%p705) target = $region40
        $region39: #{prost_forward.2} parent=27 // pred_region
          %s708 = smul.u32 2, %s22
          %s709 = smul.u32 2, %s23
        $region40: #{prost_forward.2} parent=27 // pred_fallthru
          _
      $region28: #{prost_forward.2} parent=5 // pred_fallthru
        _
      %p710 = scmp.le.s32.totalorder 2, %s11
      // Predicated region
      $region41: #{prost_forward.2} parent=5 // pred_check
        %p711 = pneg %p710
      $region42: #{prost_forward.2} parent=5 // pred_check_branch
        %713 = sbr.rel (%p711) target = $region44
      $region43: #{prost_forward.2} parent=5 // pred_region
        %s714 = ssub.s32 %s11, 2
        // Predicated region
        $region45: #{prost_forward.2} parent=43 // pred_check
          %p715 = pneg %p114
        $region46: #{prost_forward.2} parent=43 // pred_check_branch
          %717 = sbr.rel (%p715) target = $region48
        $region47: #{prost_forward.2} parent=43 // pred_region
          %s718 = smul.u32 2, %s25
          %s719 = smul.u32 2, %s26
          %p720 = scmp.lt.s32.totalorder %s24, 1
          %s721 = scalar_select %p720, %s24, 1
          %p722 = scmp.lt.s32.totalorder %s718, 1
          %s723 = scalar_select %p722, %s718, 1
          %p724 = scmp.lt.s32.totalorder %s719, 1
          %s725 = scalar_select %p724, %s719, 1
          %s726 = smul.addr %s723, 2
          %s727 = sadd.s32 %s725, %s726
          %s728 = smul.addr %s721, 32
          %s729 = sadd.s32 %s727, %s728
          %s730 = smul.addr %s729, 8
          %s731 = scalar_lea.vmem %s2, %s730
        $region48: #{prost_forward.2} parent=43 // pred_fallthru
          _
        // Predicated region
        $region49: #{prost_forward.2} parent=43 // pred_check
          %p732 = pneg %p144
        $region50: #{prost_forward.2} parent=43 // pred_check_branch
          %734 = sbr.rel (%p732) target = $region52
        $region51: #{prost_forward.2} parent=43 // pred_region
          %s735 = smul.u32 2, %s25
          %s736 = smul.u32 2, %s26
          %p737 = scmp.lt.s32.totalorder %s24, 1
          %s738 = scalar_select %p737, %s24, 1
          %p739 = scmp.lt.s32.totalorder %s735, 1
          %s740 = scalar_select %p739, %s735, 1
          %p741 = scmp.lt.s32.totalorder %s736, 1
          %s742 = scalar_select %p741, %s736, 1
          %s743 = smul.addr %s740, 2
          %s744 = sadd.s32 %s742, %s743
          %s745 = smul.addr %s738, 12
          %s746 = sadd.s32 %s744, %s745
          %s747 = smul.addr %s746, 8
          %s748 = scalar_lea.vmem %s3, %s747
        $region52: #{prost_forward.2} parent=43 // pred_fallthru
          _
      $region44: #{prost_forward.2} parent=5 // pred_fallthru
        _
    $region6: #{prost_forward.2} parent=1 // loop_footer
      %s15 = sadd.s32 1, %s11
    $region7: #{prost_forward.2} parent=1 // loop_footer_branch
      %10 = sbr.rel target = $region3
    $region8: #{prost_forward.2} parent=1 // loop_exit
      _
    %749 = vsyncpa [#allocation3], 1
    %s750 = scalar_lea.sflag [#allocation3], 1
    %751 = vsyncpa %s750, 1

// kernel: prost_forward.3
$region0: #{prost_forward.3}
  #allocation0 [shape = 'u32[]', space=smem, size = 0x4, offset = 0x4, fixed_abs, tag = 'smem constant byte address 0x4 - core index']
  #allocation1 [shape = 'u32[144,128]{1,0:T(1,128)}', space=vmem, size = 0x12000, scoped, tag = 'internal scratch']
  %s0 = inlined_call_operand.vmem [shape: bf16[2,8,16,256], index: 0, kind: input, shape index: {}]
  %s1 = inlined_call_operand.vmem [shape: f32[2,3,16,256], index: 1, kind: input, shape index: {}]
  %s2 = inlined_call_operand.vmem [shape: f32[2,1,256], index: 2, kind: output, shape index: {}]
  %s3 = sld [smem:[#allocation0]]
  $region45: #{prost_forward.3} parent=0
    _
  %s5 = ssub.s32 1, %s3
  %s6 = scalar_select 0, %s5, %s3
  loop: start=0, step=1, limit=4
  $region2: #{prost_forward.3} parent=0 // loop_pre_header
    _
  $region3: #{prost_forward.3} parent=0 // loop_header
    %s8 = sphi 0, %s12
    %p9 = scmp.ge.s32.totalorder %s8, 4
    %s15 = sphi 0, %s34
    %s16 = sphi 0, %s30
    %s17 = sphi 0, %s26
    %s18 = sphi 0, %s15
    %s19 = sphi 0, %s16
    %s20 = sphi 0, %s17
    %s21 = sphi 0, %s18
    %s22 = sphi 0, %s19
    %s23 = sphi 0, %s20
    %s41 = sphi 0, %s43
    %s44 = sphi 0, %s41
    %s45 = sphi 0, %s44
    %s61 = sphi 0, %s45
    %s71 = sphi 0, %s73
    %s74 = sphi 0, %s71
    %s75 = sphi 0, %s74
    %s91 = sphi 0, %s75
    %s99 = sphi 0, %s101
    %s102 = sphi 0, %s99
    %s103 = sphi 0, %s102
    %s119 = sphi 0, %s103
  $region4: #{prost_forward.3} parent=0 // loop_header_branch
    %11 = sbr.rel (%p9) target = $region8
  $region5: #{prost_forward.3} parent=0 // loop_body
    %s13 = ssub.s32 %s8, 1
    %s14 = ssub.s32 %s8, 2
    %s24 = sadd.s32 1, %s17
    %p25 = scmp.ge.s32.totalorder %s24, 1
    %s26 = scalar_select %p25, 0, %s24
    %s27 = sadd.s32 1, %s16
    %s28 = scalar_select %p25, %s27, %s16
    %p29 = scmp.ge.s32.totalorder %s28, 1
    %s30 = scalar_select %p29, 0, %s28
    %s31 = sadd.s32 1, %s15
    %s32 = scalar_select %p29, %s31, %s15
    %p33 = scmp.ge.s32.totalorder %s32, 2
    %s34 = scalar_select %p33, 0, %s32
    %s35 = ssub.s32 %s15, %s34
    %s36 = ssub.s32 %s17, %s26
    %s37 = sor.u32 %s35, %s36
    %s38 = ssub.s32 %s16, %s30
    %s39 = sor.u32 %s37, %s38
    %p40 = scmp.eq.s32.totalorder %s39, 0
    %s42 = sadd.s32 %s41, 1
    %s43 = scalar_select %p40, %s41, %s42
    %p46 = pneg %p40
    %p47 = scmp.eq.s32.totalorder %s8, 1
    %p48 = por %p46, %p47
    %p49 = scmp.ne.s32.totalorder %s41, %s44
    %p50 = scmp.eq.s32.totalorder %s8, 0
    %p51 = por %p49, %p50
    %p52 = scmp.ne.s32.totalorder %s41, %s44
    %p53 = scmp.eq.s32.totalorder %s13, 1
    %p54 = por %p52, %p53
    %p55 = scmp.ne.s32.totalorder %s44, %s45
    %p56 = scmp.eq.s32.totalorder %s13, 0
    %p57 = por %p55, %p56
    %p58 = scmp.ne.s32.totalorder %s44, %s45
    %p59 = scmp.eq.s32.totalorder %s14, 1
    %p60 = por %p58, %p59
    %p62 = scmp.ne.s32.totalorder %s45, %s61
    %p63 = scmp.eq.s32.totalorder %s14, 0
    %p64 = por %p62, %p63
    %s65 = ssub.s32 %s15, %s34
    %s66 = ssub.s32 %s17, %s26
    %s67 = sor.u32 %s65, %s66
    %s68 = ssub.s32 %s16, %s30
    %s69 = sor.u32 %s67, %s68
    %p70 = scmp.eq.s32.totalorder %s69, 0
    %s72 = sadd.s32 %s71, 1
    %s73 = scalar_select %p70, %s71, %s72
    %p76 = pneg %p70
    %p77 = scmp.eq.s32.totalorder %s8, 1
    %p78 = por %p76, %p77
    %p79 = scmp.ne.s32.totalorder %s71, %s74
    %p80 = scmp.eq.s32.totalorder %s8, 0
    %p81 = por %p79, %p80
    %p82 = scmp.ne.s32.totalorder %s71, %s74
    %p83 = scmp.eq.s32.totalorder %s13, 1
    %p84 = por %p82, %p83
    %p85 = scmp.ne.s32.totalorder %s74, %s75
    %p86 = scmp.eq.s32.totalorder %s13, 0
    %p87 = por %p85, %p86
    %p88 = scmp.ne.s32.totalorder %s74, %s75
    %p89 = scmp.eq.s32.totalorder %s14, 1
    %p90 = por %p88, %p89
    %p92 = scmp.ne.s32.totalorder %s75, %s91
    %p93 = scmp.eq.s32.totalorder %s14, 0
    %p94 = por %p92, %p93
    %s95 = ssub.s32 %s15, %s34
    %s96 = ssub.s32 %s16, %s30
    %s97 = sor.u32 %s95, %s96
    %p98 = scmp.eq.s32.totalorder %s97, 0
    %s100 = sadd.s32 %s99, 1
    %s101 = scalar_select %p98, %s99, %s100
    %p104 = pneg %p98
    %p105 = scmp.eq.s32.totalorder %s8, 1
    %p106 = por %p104, %p105
    %p107 = scmp.ne.s32.totalorder %s99, %s102
    %p108 = scmp.eq.s32.totalorder %s8, 0
    %p109 = por %p107, %p108
    %p110 = scmp.ne.s32.totalorder %s99, %s102
    %p111 = scmp.eq.s32.totalorder %s13, 1
    %p112 = por %p110, %p111
    %p113 = scmp.ne.s32.totalorder %s102, %s103
    %p114 = scmp.eq.s32.totalorder %s13, 0
    %p115 = por %p113, %p114
    %p116 = scmp.ne.s32.totalorder %s102, %s103
    %p117 = scmp.eq.s32.totalorder %s14, 1
    %p118 = por %p116, %p117
    %p120 = scmp.ne.s32.totalorder %s103, %s119
    %p121 = scmp.eq.s32.totalorder %s14, 0
    %p122 = por %p120, %p121
    %p123 = scmp.le.s32.totalorder 1, %s8
    %p124 = scmp.lt.s32.totalorder %s8, 3
    %p125 = pnand %p123, %p124
    %p126 = pneg %p125
    // Predicated region
    $region9: #{prost_forward.3} parent=5 // pred_check
      _
    $region10: #{prost_forward.3} parent=5 // pred_check_branch
      %128 = sbr.rel (%p125) target = $region12
    $region11: #{prost_forward.3} parent=5 // pred_region
      %s129 = ssub.s32 %s8, 1
    $region12: #{prost_forward.3} parent=5 // pred_fallthru
      _
    %p130 = scmp.lt.s32.totalorder %s8, 2
    // Predicated region
    $region13: #{prost_forward.3} parent=5 // pred_check
      %p131 = pneg %p130
    $region14: #{prost_forward.3} parent=5 // pred_check_branch
      %133 = sbr.rel (%p131) target = $region16
    $region15: #{prost_forward.3} parent=5 // pred_region
      // Predicated region
      $region17: #{prost_forward.3} parent=15 // pred_check
        %p134 = pneg %p51
      $region18: #{prost_forward.3} parent=15 // pred_check_branch
        %136 = sbr.rel (%p134) target = $region20
      $region19: #{prost_forward.3} parent=15 // pred_region
        %s137 = smul.u32 2, %s17
        %s138 = smul.u32 2, %s16
        %p139 = scmp.lt.s32.totalorder %s15, 1
        %s140 = scalar_select %p139, %s15, 1
        %p141 = scmp.lt.s32.totalorder %s137, 1
        %s142 = scalar_select %p141, %s137, 1
        %p143 = scmp.lt.s32.totalorder %s138, 1
        %s144 = scalar_select %p143, %s138, 1
        %s145 = smul.addr %s142, 2
        %s146 = sadd.s32 %s144, %s145
        %s147 = smul.addr %s140, 32
        %s148 = sadd.s32 %s146, %s147
        %s149 = smul.addr %s148, 4
        %s150 = scalar_lea.vmem %s0, %s149
        %s151 = smul.u32 2, %s17
        %s152 = smul.u32 2, %s16
      $region20: #{prost_forward.3} parent=15 // pred_fallthru
        _
      // Predicated region
      $region21: #{prost_forward.3} parent=15 // pred_check
        %p153 = pneg %p81
      $region22: #{prost_forward.3} parent=15 // pred_check_branch
        %155 = sbr.rel (%p153) target = $region24
      $region23: #{prost_forward.3} parent=15 // pred_region
        %s156 = smul.u32 2, %s17
        %s157 = smul.u32 2, %s16
        %p158 = scmp.lt.s32.totalorder %s15, 1
        %s159 = scalar_select %p158, %s15, 1
        %p160 = scmp.lt.s32.totalorder %s156, 1
        %s161 = scalar_select %p160, %s156, 1
        %p162 = scmp.lt.s32.totalorder %s157, 1
        %s163 = scalar_select %p162, %s157, 1
        %s164 = smul.addr %s161, 2
        %s165 = sadd.s32 %s163, %s164
        %s166 = smul.addr %s159, 12
        %s167 = sadd.s32 %s165, %s166
        %s168 = smul.addr %s167, 8
        %s169 = scalar_lea.vmem %s1, %s168
        %s170 = smul.u32 2, %s17
        %s171 = smul.u32 2, %s16
      $region24: #{prost_forward.3} parent=15 // pred_fallthru
        _
    $region16: #{prost_forward.3} parent=5 // pred_fallthru
      _
    %p172 = scmp.le.s32.totalorder 1, %s8
    %p173 = scmp.lt.s32.totalorder %s8, 3
    %p174 = pnand %p172, %p173
    %p175 = pneg %p174
    // Predicated region
    $region25: #{prost_forward.3} parent=5 // pred_check
      _
    $region26: #{prost_forward.3} parent=5 // pred_check_branch
      %177 = sbr.rel (%p174) target = $region28
    $region27: #{prost_forward.3} parent=5 // pred_region
      %s178 = ssub.s32 %s8, 1
      %s179 = smul.u32 2, %s20
      %s180 = smul.u32 2, %s19
      %p181 = scmp.lt.s32.totalorder %s18, 1
      %s182 = scalar_select %p181, %s18, 1
      %p183 = scmp.lt.s32.totalorder %s179, 1
      %s184 = scalar_select %p183, %s179, 1
      %p185 = scmp.lt.s32.totalorder %s180, 1
      %s186 = scalar_select %p185, %s180, 1
      %s187 = smul.addr %s184, 2
      %s188 = sadd.s32 %s186, %s187
      %s189 = smul.addr %s182, 32
      %s190 = sadd.s32 %s188, %s189
      %s191 = smul.addr %s190, 4
      %s192 = scalar_lea.vmem %s0, %s191
      %p193 = pneg %p57
      %p194 = pneg %p54
      %s195 = smul.u32 2, %s20
      %s196 = smul.u32 2, %s19
      %p197 = scmp.lt.s32.totalorder %s18, 1
      %s198 = scalar_select %p197, %s18, 1
      %p199 = scmp.lt.s32.totalorder %s195, 1
      %s200 = scalar_select %p199, %s195, 1
      %p201 = scmp.lt.s32.totalorder %s196, 1
      %s202 = scalar_select %p201, %s196, 1
      %s203 = smul.addr %s200, 2
      %s204 = sadd.s32 %s202, %s203
      %s205 = smul.addr %s198, 12
      %s206 = sadd.s32 %s204, %s205
      %s207 = smul.addr %s206, 8
      %s208 = scalar_lea.vmem %s1, %s207
      %p209 = pneg %p87
      %p210 = pneg %p84
      %p211 = pneg %p115
      %p212 = pneg %p112
      %s213 = smul.u32 2, %s19
      %p214 = scmp.lt.s32.totalorder %s18, 1
      %s215 = scalar_select %p214, %s18, 1
      %p216 = scmp.lt.s32.totalorder %s213, 1
      %s217 = scalar_select %p216, %s213, 1
      %s218 = smul.addr %s215, 2
      %s219 = sadd.s32 %s217, %s218
      %s220 = scalar_lea.vmem %s2, %s219
      %s221 = smul.u32 2, %s20
      %s222 = smul.u32 2, %s19
      %p223 = scmp.lt.s32.totalorder %s18, 1
      %s224 = scalar_select %p223, %s18, 1
      %p225 = scmp.lt.s32.totalorder %s221, 1
      %s226 = scalar_select %p225, %s221, 1
      %p227 = scmp.lt.s32.totalorder %s222, 1
      %s228 = scalar_select %p227, %s222, 1
      %s229 = smul.addr %s226, 2
      %s230 = sadd.s32 %s228, %s229
      %s231 = smul.addr %s224, 32
      %s232 = sadd.s32 %s230, %s231
      %s233 = smul.addr %s232, 4
      %s234 = scalar_lea.vmem %s0, %s233
      %s235 = smul.u32 2, %s20
      %s236 = smul.u32 2, %s19
      %s237 = smul.u32 2, %s20
      %s238 = smul.u32 2, %s19
      %p239 = scmp.lt.s32.totalorder %s18, 1
      %s240 = scalar_select %p239, %s18, 1
      %p241 = scmp.lt.s32.totalorder %s237, 1
      %s242 = scalar_select %p241, %s237, 1
      %p243 = scmp.lt.s32.totalorder %s238, 1
      %s244 = scalar_select %p243, %s238, 1
      %s245 = smul.addr %s242, 2
      %s246 = sadd.s32 %s244, %s245
      %s247 = smul.addr %s240, 12
      %s248 = sadd.s32 %s246, %s247
      %s249 = smul.addr %s248, 8
      %s250 = scalar_lea.vmem %s1, %s249
      %s251 = smul.u32 2, %s20
      %s252 = smul.u32 2, %s19
      %s253 = smul.u32 2, %s19
      %p254 = scmp.lt.s32.totalorder %s18, 1
      %s255 = scalar_select %p254, %s18, 1
      %p256 = scmp.lt.s32.totalorder %s253, 1
      %s257 = scalar_select %p256, %s253, 1
      %s258 = smul.addr %s255, 2
      %s259 = sadd.s32 %s257, %s258
      %s260 = scalar_lea.vmem %s2, %s259
      %s261 = smul.u32 2, %s19
      %v262 = vld [vmem:[%s250] sm:$0xff]
      %v263 = vld [vmem:[%s250 + $0x8] sm:$0xff]
      %v264 = vld [vmem:[%s250 + $0x10] sm:$0xff]
      %v265 = vld [vmem:[%s250 + $0x18] sm:$0xff]
      %s266 = scalar_lea.vmem %s250, 32
      %v267 = vld [vmem:[%s266] sm:$0xff]
      %v268 = vld [vmem:[%s266 + $0x8] sm:$0xff]
      %v269 = vld [vmem:[%s266 + $0x10] sm:$0xff]
      %v270 = vld [vmem:[%s266 + $0x18] sm:$0xff]
      %s271 = scalar_lea.vmem %s250, 64
      %v272 = vld [vmem:[%s271] sm:$0xff]
      %v273 = vld [vmem:[%s271 + $0x8] sm:$0xff]
      %v274 = vld [vmem:[%s271 + $0x10] sm:$0xff]
      %v275 = vld [vmem:[%s271 + $0x18] sm:$0xff]
      %v276 = vsub.f32 1.0, %v262
      %v277 = vsub.f32 1.0, %v263
      %v278 = vsub.f32 1.0, %v264
      %v279 = vsub.f32 1.0, %v265
      %v280 = vld [vmem:[%s234] sm:$0xff]
      %v281 = vld [vmem:[%s234 + $0x8] sm:$0xff]
      %v282 = vunpack.c.l.bf16 %v280
      %v283 = vunpack.c.h.bf16 %v280
      %v284 = vunpack.c.l.bf16 %v281
      %v285 = vunpack.c.h.bf16 %v281
      %v286 = vmul.f32 %v282, %v276
      %v287 = vmul.f32 %v283, %v277
      %v288 = vmul.f32 %v284, %v278
      %v289 = vmul.f32 %v285, %v279
      %s290 = scalar_lea.vmem %s234, 16
      %v291 = vld [vmem:[%s290] sm:$0xff]
      %v292 = vld [vmem:[%s290 + $0x8] sm:$0xff]
      %v293 = vunpack.c.l.bf16 %v291
      %v294 = vunpack.c.h.bf16 %v291
      %v295 = vunpack.c.l.bf16 %v292
      %v296 = vunpack.c.h.bf16 %v292
      %v297 = vmul.f32 %v293, %v262
      %v298 = vmul.f32 %v294, %v263
      %v299 = vmul.f32 %v295, %v264
      %v300 = vmul.f32 %v296, %v265
      %v301 = vadd.f32 %v286, %v297
      %v302 = vadd.f32 %v287, %v298
      %v303 = vadd.f32 %v288, %v299
      %v304 = vadd.f32 %v289, %v300
      %s305 = scalar_lea.vmem %s234, 32
      %v306 = vld [vmem:[%s305] sm:$0xff]
      %v307 = vld [vmem:[%s305 + $0x8] sm:$0xff]
      %v308 = vunpack.c.l.bf16 %v306
      %v309 = vunpack.c.h.bf16 %v306
      %v310 = vunpack.c.l.bf16 %v307
      %v311 = vunpack.c.h.bf16 %v307
      %v312 = vmul.f32 %v308, %v276
      %v313 = vmul.f32 %v309, %v277
      %v314 = vmul.f32 %v310, %v278
      %v315 = vmul.f32 %v311, %v279
      %s316 = scalar_lea.vmem %s234, 48
      %v317 = vld [vmem:[%s316] sm:$0xff]
      %v318 = vld [vmem:[%s316 + $0x8] sm:$0xff]
      %v319 = vunpack.c.l.bf16 %v317
      %v320 = vunpack.c.h.bf16 %v317
      %v321 = vunpack.c.l.bf16 %v318
      %v322 = vunpack.c.h.bf16 %v318
      %v323 = vmul.f32 %v319, %v262
      %v324 = vmul.f32 %v320, %v263
      %v325 = vmul.f32 %v321, %v264
      %v326 = vmul.f32 %v322, %v265
      %v327 = vadd.f32 %v312, %v323
      %v328 = vadd.f32 %v313, %v324
      %v329 = vadd.f32 %v314, %v325
      %v330 = vadd.f32 %v315, %v326
      %s331 = scalar_lea.vmem %s234, 64
      %v332 = vld [vmem:[%s331] sm:$0xff]
      %v333 = vld [vmem:[%s331 + $0x8] sm:$0xff]
      %v334 = vunpack.c.l.bf16 %v332
      %v335 = vunpack.c.h.bf16 %v332
      %v336 = vunpack.c.l.bf16 %v333
      %v337 = vunpack.c.h.bf16 %v333
      %v338 = vmul.f32 %v334, %v276
      %v339 = vmul.f32 %v335, %v277
      %v340 = vmul.f32 %v336, %v278
      %v341 = vmul.f32 %v337, %v279
      %s342 = scalar_lea.vmem %s234, 80
      %v343 = vld [vmem:[%s342] sm:$0xff]
      %v344 = vld [vmem:[%s342 + $0x8] sm:$0xff]
      %v345 = vunpack.c.l.bf16 %v343
      %v346 = vunpack.c.h.bf16 %v343
      %v347 = vunpack.c.l.bf16 %v344
      %v348 = vunpack.c.h.bf16 %v344
      %v349 = vmul.f32 %v345, %v262
      %v350 = vmul.f32 %v346, %v263
      %v351 = vmul.f32 %v347, %v264
      %v352 = vmul.f32 %v348, %v265
      %v353 = vadd.f32 %v338, %v349
      %v354 = vadd.f32 %v339, %v350
      %v355 = vadd.f32 %v340, %v351
      %v356 = vadd.f32 %v341, %v352
      %s357 = scalar_lea.vmem %s234, 96
      %v358 = vld [vmem:[%s357] sm:$0xff]
      %v359 = vld [vmem:[%s357 + $0x8] sm:$0xff]
      %v360 = vunpack.c.l.bf16 %v358
      %v361 = vunpack.c.h.bf16 %v358
      %v362 = vunpack.c.l.bf16 %v359
      %v363 = vunpack.c.h.bf16 %v359
      %v364 = vmul.f32 %v360, %v276
      %v365 = vmul.f32 %v361, %v277
      %v366 = vmul.f32 %v362, %v278
      %v367 = vmul.f32 %v363, %v279
      %s368 = scalar_lea.vmem %s234, 112
      %v369 = vld [vmem:[%s368] sm:$0xff]
      %v370 = vld [vmem:[%s368 + $0x8] sm:$0xff]
      %v371 = vunpack.c.l.bf16 %v369
      %v372 = vunpack.c.h.bf16 %v369
      %v373 = vunpack.c.l.bf16 %v370
      %v374 = vunpack.c.h.bf16 %v370
      %v375 = vmul.f32 %v371, %v262
      %v376 = vmul.f32 %v372, %v263
      %v377 = vmul.f32 %v373, %v264
      %v378 = vmul.f32 %v374, %v265
      %v379 = vadd.f32 %v364, %v375
      %v380 = vadd.f32 %v365, %v376
      %v381 = vadd.f32 %v366, %v377
      %v382 = vadd.f32 %v367, %v378
      %v383 = vsub.f32 1.0, %v267
      %v384 = vsub.f32 1.0, %v268
      %v385 = vsub.f32 1.0, %v269
      %v386 = vsub.f32 1.0, %v270
      %v387 = vmul.f32 %v301, %v383
      %v388 = vmul.f32 %v302, %v384
      %v389 = vmul.f32 %v303, %v385
      %v390 = vmul.f32 %v304, %v386
      %v391 = vmul.f32 %v327, %v267
      %v392 = vmul.f32 %v328, %v268
      %v393 = vmul.f32 %v329, %v269
      %v394 = vmul.f32 %v330, %v270
      %v395 = vadd.f32 %v387, %v391
      %v396 = vadd.f32 %v388, %v392
      %v397 = vadd.f32 %v389, %v393
      %v398 = vadd.f32 %v390, %v394
      %v399 = vmul.f32 %v353, %v383
      %v400 = vmul.f32 %v354, %v384
      %v401 = vmul.f32 %v355, %v385
      %v402 = vmul.f32 %v356, %v386
      %v403 = vmul.f32 %v379, %v267
      %v404 = vmul.f32 %v380, %v268
      %v405 = vmul.f32 %v381, %v269
      %v406 = vmul.f32 %v382, %v270
      %v407 = vadd.f32 %v399, %v403
      %v408 = vadd.f32 %v400, %v404
      %v409 = vadd.f32 %v401, %v405
      %v410 = vadd.f32 %v402, %v406
      %v411 = vsub.f32 1.0, %v272
      %v412 = vsub.f32 1.0, %v273
      %v413 = vsub.f32 1.0, %v274
      %v414 = vsub.f32 1.0, %v275
      %v415 = vmul.f32 %v395, %v411
      %v416 = vmul.f32 %v396, %v412
      %v417 = vmul.f32 %v397, %v413
      %v418 = vmul.f32 %v398, %v414
      %v419 = vmul.f32 %v407, %v272
      %v420 = vmul.f32 %v408, %v273
      %v421 = vmul.f32 %v409, %v274
      %v422 = vmul.f32 %v410, %v275
      %v423 = vadd.f32 %v415, %v419
      %v424 = vadd.f32 %v416, %v420
      %v425 = vadd.f32 %v417, %v421
      %v426 = vadd.f32 %v418, %v422
      %v427 = vadd.f32 %v423, %v425
      %v428 = vrot.slane %v427, 4
      %v429 = vadd.f32 %v427, %v428
      %v430 = vrot.slane %v429, 2
      %v431 = vadd.f32 %v429, %v430
      %v432 = vrot.slane %v431, 1
      %v433 = vadd.f32 %v431, %v432
      %v434 = vadd.f32 %v424, %v426
      %v435 = vrot.slane %v434, 4
      %v436 = vadd.f32 %v434, %v435
      %v437 = vrot.slane %v436, 2
      %v438 = vadd.f32 %v436, %v437
      %v439 = vrot.slane %v438, 1
      %v440 = vadd.f32 %v438, %v439
      %p441 = scmp.eq.s32.totalorder %s20, 0
      // Predicated region
      $region29: #{prost_forward.3} parent=27 // pred_check
        %p442 = pneg %p441
      $region30: #{prost_forward.3} parent=27 // pred_check_branch
        %444 = sbr.rel (%p442) target = $region32
      $region31: #{prost_forward.3} parent=27 // pred_region
        %v445 = vlaneseq
        %vm446 = vcmp.ge.s32.totalorder %v445, 0
        %vm447 = vcmp.lt.s32.totalorder %v445, 256
        %vm448 = vmand %vm446, %vm447
        %449 = vst.msk [vmem:[%s260] sm:$0x3] %vm448, 0.0
      $region32: #{prost_forward.3} parent=27 // pred_fallthru
        _
      %v450 = vld [vmem:[%s260] sm:$0x3]
      %v453 = vcombine.low %v433, %v440
      %v455 = vunpack.c.l.s4 1966171168
      %v456 = vunpack.c.0.s8 %v455
      %v457 = vlaneseq
      %v458 = vshrl.u32 %v457, 7
      %v459 = vsub.s32 %v456, %v458
      %v460 = vrot.slane %v453, %v459
      %v462 = vunpack.c.l.s4 1966171168
      %v463 = vunpack.c.0.s8 %v462
      %v464 = vlaneseq
      %v465 = vshrl.u32 %v464, 7
      %v466 = vsub.s32 %v463, %v465
      %v467 = vrot.slane %v460, %v466
      %v469 = vadd.f32 %v450, %v467
      %v470 = vlaneseq
      %vm471 = vcmp.ge.s32.totalorder %v470, 0
      %vm472 = vcmp.lt.s32.totalorder %v470, 256
      %vm473 = vmand %vm471, %vm472
      %474 = vst.msk [vmem:[%s260] sm:$0x3] %vm473, %v469
      %s475 = smul.u32 2, %s19
      %p476 = scmp.lt.s32.totalorder %s18, 1
      %s477 = scalar_select %p476, %s18, 1
      %p478 = scmp.lt.s32.totalorder %s475, 1
      %s479 = scalar_select %p478, %s475, 1
      %s480 = smul.addr %s477, 2
      %s481 = sadd.s32 %s479, %s480
      %s482 = scalar_lea.vmem %s2, %s481
      // Predicated region
      $region33: #{prost_forward.3} parent=27 // pred_check
        %p483 = pneg %p112
      $region34: #{prost_forward.3} parent=27 // pred_check_branch
        %485 = sbr.rel (%p483) target = $region36
      $region35: #{prost_forward.3} parent=27 // pred_region
        %s486 = smul.u32 2, %s19
      $region36: #{prost_forward.3} parent=27 // pred_fallthru
        _
    $region28: #{prost_forward.3} parent=5 // pred_fallthru
      _
    %p487 = scmp.le.s32.totalorder 2, %s8
    // Predicated region
    $region37: #{prost_forward.3} parent=5 // pred_check
      %p488 = pneg %p487
    $region38: #{prost_forward.3} parent=5 // pred_check_branch
      %490 = sbr.rel (%p488) target = $region40
    $region39: #{prost_forward.3} parent=5 // pred_region
      %s491 = ssub.s32 %s8, 2
      // Predicated region
      $region41: #{prost_forward.3} parent=39 // pred_check
        %p492 = pneg %p118
      $region42: #{prost_forward.3} parent=39 // pred_check_branch
        %494 = sbr.rel (%p492) target = $region44
      $region43: #{prost_forward.3} parent=39 // pred_region
        %s495 = smul.u32 2, %s22
        %p496 = scmp.lt.s32.totalorder %s21, 1
        %s497 = scalar_select %p496, %s21, 1
        %p498 = scmp.lt.s32.totalorder %s495, 1
        %s499 = scalar_select %p498, %s495, 1
        %s500 = smul.addr %s497, 2
        %s501 = sadd.s32 %s499, %s500
        %s502 = scalar_lea.vmem %s2, %s501
      $region44: #{prost_forward.3} parent=39 // pred_fallthru
        _
    $region40: #{prost_forward.3} parent=5 // pred_fallthru
      _
  $region6: #{prost_forward.3} parent=0 // loop_footer
    %s12 = sadd.s32 1, %s8
  $region7: #{prost_forward.3} parent=0 // loop_footer_branch
    %7 = sbr.rel target = $region3
  $region8: #{prost_forward.3} parent=0 // loop_exit
    _

</llo_original>
